<compile_context>
chip_gen: v5e
topology: v5e:2x2
jax: 0.10.0
libtpu: 0.0.40
codegen_flags: <defaults>
</compile_context>

<pallas_src>
import jax
import jax.numpy as jnp
import numpy as np
from jax.experimental import pallas as pl
from jax.experimental.pallas import tpu as pltpu


# --------------------------------------------------------------------------
# Fused kernel: BN1 -> ReLU -> conv1x1(+BN2 scale) -> (+BN2 shift) -> ReLU
#               -> 3x3 conv (padding=1) straight from VMEM scratch.
# One grid step == one batch element, full spatial extent.
# --------------------------------------------------------------------------
def dense_layer_fused_kernel(x_ref, s1_ref, b1_ref, w1f_ref, b2_ref, w2_ref,
                             o_ref, bott_ref):
    # x_ref:   (1, H*W, Cin)    f32
    # w1f_ref: (Cin, Cmid)      bf16   (BN2 scale already folded in)
    # w2_ref:  (3, 3, Cmid, Cout) bf16
    # o_ref:   (1, H*W, Cout)   f32
    # bott_ref:(H+2, W+2, Cmid) f32 VMEM scratch (zero halo for pad=1)
    Hp2, Wp2, Cmid = bott_ref.shape
    H, W = Hp2 - 2, Wp2 - 2
    Cout = w2_ref.shape[3]

    # ---- BN1 + ReLU1 (f32, VPU) ------------------------------------------
    x = x_ref[0]                                               # (H*W, Cin)
    y = jnp.maximum(x * s1_ref[0] + b1_ref[0], 0.0)

    # ---- 1x1 conv (BN2 scale folded into w1f): one 2-D MXU matmul ---------
    z = jnp.dot(y.astype(jnp.bfloat16), w1f_ref[...],
                preferred_element_type=jnp.float32)            # (H*W, Cmid) f32
    z = jnp.maximum(z + b2_ref[0], 0.0)                        # BN2 shift + ReLU2

    # ---- activated bottleneck -> zero-padded VMEM scratch (1-px halo) -----
    # Never leaves VMEM: no intermediate HBM output, no wrapper jnp.pad.
    bott_ref[...] = jnp.zeros_like(bott_ref)
    bott_ref[1:H + 1, 1:W + 1, :] = z.reshape(H, W, Cmid)

    # ---- 3x3 conv, padding=1, as 9 shifted channel matmuls (MXU, f32 acc) -
    acc = jnp.zeros((H * W, Cout), dtype=jnp.float32)
    for kh in range(3):                                        # fully unrolled
        for kw in range(3):
            win = bott_ref[kh:kh + H, kw:kw + W, :]            # (H, W, Cmid)
            win = win.reshape(H * W, Cmid).astype(jnp.bfloat16)
            acc = acc + jnp.dot(win, w2_ref[kh, kw],
                                preferred_element_type=jnp.float32)

    o_ref[0] = acc.astype(o_ref.dtype)


# --------------------------------------------------------------------------
# Wrapper
# --------------------------------------------------------------------------
def dense_layer_forward(prev_features_nchw, params):
    """prev_features_nchw: list of (N, Ci, H, W) float32 arrays. Returns NCHW."""
    x = jnp.concatenate(prev_features_nchw, axis=1)            # (N, Cin, H, W)
    N, Cin, H, W = x.shape
    # channels-last, spatial flattened: (N, H*W, Cin)
    x = jnp.transpose(x, (0, 2, 3, 1)).reshape(N, H * W, Cin).astype(jnp.float32)

    s1 = params['bn1_scale'][None, :]                          # (1, Cin)
    b1 = params['bn1_shift'][None, :]                          # (1, Cin)
    b2 = params['bn2_shift'][None, :]                          # (1, Cmid)
    # BN2 is linear and directly follows the (linear) 1x1 conv, so its scale
    # folds exactly into the conv weights; only the shift stays in-kernel.
    w1f = (params['w1'] * params['bn2_scale'][None, :]).astype(jnp.bfloat16)
    w2 = params['w2'].astype(jnp.bfloat16)                     # (3, 3, Cmid, Cout)
    Cmid = w1f.shape[1]
    Cout = w2.shape[3]

    out = pl.pallas_call(
        dense_layer_fused_kernel,
        out_shape=jax.ShapeDtypeStruct((N, H * W, Cout), jnp.float32),
        grid_spec=pltpu.PrefetchScalarGridSpec(
            num_scalar_prefetch=0,
            grid=(N,),
            in_specs=[
                pl.BlockSpec((1, H * W, Cin), lambda n: (n, 0, 0)),
                pl.BlockSpec((1, Cin), lambda n: (0, 0)),
                pl.BlockSpec((1, Cin), lambda n: (0, 0)),
                pl.BlockSpec((Cin, Cmid), lambda n: (0, 0)),
                pl.BlockSpec((1, Cmid), lambda n: (0, 0)),
                pl.BlockSpec((3, 3, Cmid, Cout), lambda n: (0, 0, 0, 0)),
            ],
            out_specs=pl.BlockSpec((1, H * W, Cout), lambda n: (n, 0, 0)),
            # Padded bottleneck lives here (f32 for robust sub-tile stores;
            # MXU operands are cast to bf16 at the dot).
            scratch_shapes=[pltpu.VMEM((H + 2, W + 2, Cmid), jnp.float32)],
        ),
        compiler_params=pltpu.CompilerParams(
            dimension_semantics=("parallel",)),
    )(x, s1, b1, w1f, b2, w2)

    # Dropout: eval-mode identity (see TODO above).
    out = out.reshape(N, H, W, Cout)
    return jnp.transpose(out, (0, 3, 1, 2))                    # back to NCHW


# --------------------------------------------------------------------------
# Pure-JAX reference (exact f32, un-folded params) for correctness check
# --------------------------------------------------------------------------
def dense_layer_reference(prev_features_nchw, params):
    x = jnp.concatenate(prev_features_nchw, axis=1)            # NCHW
    s1 = params['bn1_scale'][None, :, None, None]
    b1 = params['bn1_shift'][None, :, None, None]
    y = jnp.maximum(x * s1 + b1, 0.0)
    w1 = jnp.transpose(params['w1'], (1, 0))[:, :, None, None]   # (Cmid,Cin,1,1)
    z = jax.lax.conv_general_dilated(y, w1, (1, 1), 'VALID',
                                     dimension_numbers=('NCHW', 'OIHW', 'NCHW'))
    s2 = params['bn2_scale'][None, :, None, None]
    b2 = params['bn2_shift'][None, :, None, None]
    a = jnp.maximum(z * s2 + b2, 0.0)
    w2 = jnp.transpose(params['w2'], (3, 2, 0, 1))               # (Cout,Cmid,3,3)
    return jax.lax.conv_general_dilated(a, w2, (1, 1), ((1, 1), (1, 1)),
                                        dimension_numbers=('NCHW', 'OIHW', 'NCHW'))


# --------------------------------------------------------------------------
def make_params(key, num_input_features, growth_rate, bn_size):
    Cin = num_input_features
    Cmid = bn_size * growth_rate
    Cout = growth_rate
    eps = 1e-5
    ks = jax.random.split(key, 10)

    gamma1 = jax.random.uniform(ks[0], (Cin,), minval=0.5, maxval=1.5)
    beta1 = jax.random.normal(ks[1], (Cin,)) * 0.1
    mean1 = jax.random.normal(ks[2], (Cin,)) * 0.1
    var1 = jax.random.uniform(ks[3], (Cin,), minval=0.5, maxval=1.5)

    gamma2 = jax.random.uniform(ks[4], (Cmid,), minval=0.5, maxval=1.5)
    beta2 = jax.random.normal(ks[5], (Cmid,)) * 0.1
    mean2 = jax.random.normal(ks[6], (Cmid,)) * 0.1
    var2 = jax.random.uniform(ks[7], (Cmid,), minval=0.5, maxval=1.5)

    # PyTorch conv weights: (out, in, kh, kw). Stored here in kernel layouts.
    w1 = jax.random.normal(ks[8], (Cin, Cmid)) * 0.1            # 1x1 conv (Cin, Cmid)
    w2 = jax.random.normal(ks[9], (3, 3, Cmid, Cout)) * 0.1     # 3x3 conv HWIO

    scale1 = gamma1 / jnp.sqrt(var1 + eps)
    shift1 = beta1 - mean1 * scale1
    scale2 = gamma2 / jnp.sqrt(var2 + eps)
    shift2 = beta2 - mean2 * scale2

    return dict(bn1_scale=scale1.astype(jnp.float32),
                bn1_shift=shift1.astype(jnp.float32),
                w1=w1.astype(jnp.float32),
                bn2_scale=scale2.astype(jnp.float32),
                bn2_shift=shift2.astype(jnp.float32),
                w2=w2.astype(jnp.float32))


if __name__ == "__main__":
    # _DenseLayer(num_input_features=8, growth_rate=4, bn_size=2, drop_rate=0.0)
    N, H, W = 2, 16, 16
    growth_rate, bn_size = 4, 2
    num_input_features = 8

    key = jax.random.PRNGKey(0)
    kx1, kx2, kp = jax.random.split(key, 3)
    # two "previous feature maps" of 4 channels each -> concat to 8 channels
    prev1 = jax.random.normal(kx1, (N, 4, H, W), dtype=jnp.float32)
    prev2 = jax.random.normal(kx2, (N, 4, H, W), dtype=jnp.float32)
    params = make_params(kp, num_input_features, growth_rate, bn_size)

    out = jax.block_until_ready(dense_layer_forward([prev1, prev2], params))
    ref = jax.block_until_ready(dense_layer_reference([prev1, prev2], params))

    assert out.shape == (N, growth_rate, H, W), out.shape
    # bf16 MXU operands (f32 accumulation) vs f32 reference -> looser tolerance.
    np.testing.assert_allclose(np.asarray(out), np.asarray(ref),
                               rtol=2e-2, atol=2e-2)
    print("KERNEL_OK")
</pallas_src>

<mosaic_0001>
module attributes {stable_mosaic.version = 11 : i64} {
  func.func @dense_layer_fused_kernel(%arg0: i32, %arg1: memref<1x256x8xf32, #tpu.memory_space<vmem>>, %arg2: memref<1x8xf32, #tpu.memory_space<vmem>>, %arg3: memref<1x8xf32, #tpu.memory_space<vmem>>, %arg4: memref<8x8xbf16, #tpu.memory_space<vmem>>, %arg5: memref<1x8xf32, #tpu.memory_space<vmem>>, %arg6: memref<3x3x8x4xbf16, #tpu.memory_space<vmem>>, %arg7: memref<1x256x4xf32, #tpu.memory_space<vmem>>, %arg8: memref<18x18x8xf32, #tpu.memory_space<vmem>>) attributes {dimension_semantics = [#tpu.dimension_semantics<parallel>], iteration_bounds = array<i64: 2>, scalar_prefetch = 0 : i64, scratch_operands = 1 : i64, tpu.core_type = #tpu.core_type<tc>, window_params = [{transform_indices = @transform_0, window_bounds = array<i64: 1, 256, 8>}, {pipeline_mode = #tpu.pipeline_mode<synchronous>, transform_indices = @transform_1, window_bounds = array<i64: 1, 8>}, {pipeline_mode = #tpu.pipeline_mode<synchronous>, transform_indices = @transform_2, window_bounds = array<i64: 1, 8>}, {pipeline_mode = #tpu.pipeline_mode<synchronous>, transform_indices = @transform_3, window_bounds = array<i64: 8, 8>}, {pipeline_mode = #tpu.pipeline_mode<synchronous>, transform_indices = @transform_4, window_bounds = array<i64: 1, 8>}, {pipeline_mode = #tpu.pipeline_mode<synchronous>, transform_indices = @transform_5, window_bounds = array<i64: 3, 3, 8, 4>}, {transform_indices = @transform_6, window_bounds = array<i64: 1, 256, 4>}]} {
    %c0 = arith.constant 0 : index
    %c0_0 = arith.constant 0 : index
    %c0_1 = arith.constant 0 : index
    %0 = vector.load %arg1[%c0, %c0_0, %c0_1] : memref<1x256x8xf32, #tpu.memory_space<vmem>>, vector<1x256x8xf32>
    %1 = vector.shape_cast %0 : vector<1x256x8xf32> to vector<256x8xf32>
    %c0_2 = arith.constant 0 : index
    %c0_3 = arith.constant 0 : index
    %2 = vector.load %arg2[%c0_2, %c0_3] : memref<1x8xf32, #tpu.memory_space<vmem>>, vector<1x8xf32>
    %3 = vector.shape_cast %2 : vector<1x8xf32> to vector<8xf32>
    %4 = vector.shape_cast %3 : vector<8xf32> to vector<1x8xf32>
    %5 = vector.broadcast %4 : vector<1x8xf32> to vector<256x8xf32>
    %6 = arith.mulf %1, %5 : vector<256x8xf32>
    %c0_4 = arith.constant 0 : index
    %c0_5 = arith.constant 0 : index
    %7 = vector.load %arg3[%c0_4, %c0_5] : memref<1x8xf32, #tpu.memory_space<vmem>>, vector<1x8xf32>
    %8 = vector.shape_cast %7 : vector<1x8xf32> to vector<8xf32>
    %9 = vector.shape_cast %8 : vector<8xf32> to vector<1x8xf32>
    %10 = vector.broadcast %9 : vector<1x8xf32> to vector<256x8xf32>
    %11 = arith.addf %6, %10 : vector<256x8xf32>
    %cst = arith.constant 0.000000e+00 : f32
    %12 = vector.broadcast %cst : f32 to vector<256x8xf32>
    %13 = arith.maximumf %11, %12 : vector<256x8xf32>
    %14 = arith.truncf %13 : vector<256x8xf32> to vector<256x8xbf16>
    %c0_6 = arith.constant 0 : index
    %c0_7 = arith.constant 0 : index
    %15 = vector.load %arg4[%c0_6, %c0_7] : memref<8x8xbf16, #tpu.memory_space<vmem>>, vector<8x8xbf16>
    %cst_8 = arith.constant dense<0.000000e+00> : vector<256x8xf32>
    %16 = tpu.matmul %14, %15, %cst_8 {dimension_numbers = #tpu.dot_dimension_numbers<[1], [0], [0], [1], [0, 0, 1, 1], [], []>} : vector<256x8xbf16>, vector<8x8xbf16>, vector<256x8xf32> -> vector<256x8xf32>
    %c0_9 = arith.constant 0 : index
    %c0_10 = arith.constant 0 : index
    %17 = vector.load %arg5[%c0_9, %c0_10] : memref<1x8xf32, #tpu.memory_space<vmem>>, vector<1x8xf32>
    %18 = vector.shape_cast %17 : vector<1x8xf32> to vector<8xf32>
    %19 = vector.shape_cast %18 : vector<8xf32> to vector<1x8xf32>
    %20 = vector.broadcast %19 : vector<1x8xf32> to vector<256x8xf32>
    %21 = arith.addf %16, %20 : vector<256x8xf32>
    %cst_11 = arith.constant 0.000000e+00 : f32
    %22 = vector.broadcast %cst_11 : f32 to vector<256x8xf32>
    %23 = arith.maximumf %21, %22 : vector<256x8xf32>
    %cst_12 = arith.constant 0.000000e+00 : f32
    %24 = vector.broadcast %cst_12 : f32 to vector<18x18x8xf32>
    %c0_13 = arith.constant 0 : index
    %c0_14 = arith.constant 0 : index
    %c0_15 = arith.constant 0 : index
    %25 = vector.load %arg8[%c0_13, %c0_14, %c0_15] : memref<18x18x8xf32, #tpu.memory_space<vmem>>, vector<18x18x8xf32>
    tpu.vector_store %arg8[%c0_13, %c0_14, %c0_15], %24 {strides = array<i32>} : memref<18x18x8xf32, #tpu.memory_space<vmem>>, vector<18x18x8xf32>,
    %26 = vector.shape_cast %23 : vector<256x8xf32> to vector<16x16x8xf32>
    %c1 = arith.constant 1 : index
    %c1_16 = arith.constant 1 : index
    %c0_17 = arith.constant 0 : index
    %27 = vector.load %arg8[%c1, %c1_16, %c0_17] : memref<18x18x8xf32, #tpu.memory_space<vmem>>, vector<16x16x8xf32>
    tpu.vector_store %arg8[%c1, %c1_16, %c0_17], %26 {strides = array<i32>} : memref<18x18x8xf32, #tpu.memory_space<vmem>>, vector<16x16x8xf32>,
    %cst_18 = arith.constant 0.000000e+00 : f32
    %28 = vector.broadcast %cst_18 : f32 to vector<256x4xf32>
    %c0_19 = arith.constant 0 : index
    %c0_20 = arith.constant 0 : index
    %c0_21 = arith.constant 0 : index
    %29 = vector.load %arg8[%c0_19, %c0_20, %c0_21] : memref<18x18x8xf32, #tpu.memory_space<vmem>>, vector<16x16x8xf32>
    %30 = vector.shape_cast %29 : vector<16x16x8xf32> to vector<256x8xf32>
    %31 = arith.truncf %30 : vector<256x8xf32> to vector<256x8xbf16>
    %c0_22 = arith.constant 0 : index
    %c0_23 = arith.constant 0 : index
    %c0_24 = arith.constant 0 : index
    %c0_25 = arith.constant 0 : index
    %32 = vector.load %arg6[%c0_22, %c0_23, %c0_24, %c0_25] : memref<3x3x8x4xbf16, #tpu.memory_space<vmem>>, vector<1x1x8x4xbf16>
    %33 = vector.shape_cast %32 : vector<1x1x8x4xbf16> to vector<8x4xbf16>
    %cst_26 = arith.constant dense<0.000000e+00> : vector<256x4xf32>
    %34 = tpu.matmul %31, %33, %cst_26 {dimension_numbers = #tpu.dot_dimension_numbers<[1], [0], [0], [1], [0, 0, 1, 1], [], []>} : vector<256x8xbf16>, vector<8x4xbf16>, vector<256x4xf32> -> vector<256x4xf32>
    %35 = arith.addf %28, %34 : vector<256x4xf32>
    %c0_27 = arith.constant 0 : index
    %c1_28 = arith.constant 1 : index
    %c0_29 = arith.constant 0 : index
    %36 = vector.load %arg8[%c0_27, %c1_28, %c0_29] : memref<18x18x8xf32, #tpu.memory_space<vmem>>, vector<16x16x8xf32>
    %37 = vector.shape_cast %36 : vector<16x16x8xf32> to vector<256x8xf32>
    %38 = arith.truncf %37 : vector<256x8xf32> to vector<256x8xbf16>
    %c0_30 = arith.constant 0 : index
    %c1_31 = arith.constant 1 : index
    %c0_32 = arith.constant 0 : index
    %c0_33 = arith.constant 0 : index
    %39 = vector.load %arg6[%c0_30, %c1_31, %c0_32, %c0_33] : memref<3x3x8x4xbf16, #tpu.memory_space<vmem>>, vector<1x1x8x4xbf16>
    %40 = vector.shape_cast %39 : vector<1x1x8x4xbf16> to vector<8x4xbf16>
    %cst_34 = arith.constant dense<0.000000e+00> : vector<256x4xf32>
    %41 = tpu.matmul %38, %40, %cst_34 {dimension_numbers = #tpu.dot_dimension_numbers<[1], [0], [0], [1], [0, 0, 1, 1], [], []>} : vector<256x8xbf16>, vector<8x4xbf16>, vector<256x4xf32> -> vector<256x4xf32>
    %42 = arith.addf %35, %41 : vector<256x4xf32>
    %c0_35 = arith.constant 0 : index
    %c2 = arith.constant 2 : index
    %c0_36 = arith.constant 0 : index
    %43 = vector.load %arg8[%c0_35, %c2, %c0_36] : memref<18x18x8xf32, #tpu.memory_space<vmem>>, vector<16x16x8xf32>
    %44 = vector.shape_cast %43 : vector<16x16x8xf32> to vector<256x8xf32>
    %45 = arith.truncf %44 : vector<256x8xf32> to vector<256x8xbf16>
    %c0_37 = arith.constant 0 : index
    %c2_38 = arith.constant 2 : index
    %c0_39 = arith.constant 0 : index
    %c0_40 = arith.constant 0 : index
    %46 = vector.load %arg6[%c0_37, %c2_38, %c0_39, %c0_40] : memref<3x3x8x4xbf16, #tpu.memory_space<vmem>>, vector<1x1x8x4xbf16>
    %47 = vector.shape_cast %46 : vector<1x1x8x4xbf16> to vector<8x4xbf16>
    %cst_41 = arith.constant dense<0.000000e+00> : vector<256x4xf32>
    %48 = tpu.matmul %45, %47, %cst_41 {dimension_numbers = #tpu.dot_dimension_numbers<[1], [0], [0], [1], [0, 0, 1, 1], [], []>} : vector<256x8xbf16>, vector<8x4xbf16>, vector<256x4xf32> -> vector<256x4xf32>
    %49 = arith.addf %42, %48 : vector<256x4xf32>
    %c1_42 = arith.constant 1 : index
    %c0_43 = arith.constant 0 : index
    %c0_44 = arith.constant 0 : index
    %50 = vector.load %arg8[%c1_42, %c0_43, %c0_44] : memref<18x18x8xf32, #tpu.memory_space<vmem>>, vector<16x16x8xf32>
    %51 = vector.shape_cast %50 : vector<16x16x8xf32> to vector<256x8xf32>
    %52 = arith.truncf %51 : vector<256x8xf32> to vector<256x8xbf16>
    %c1_45 = arith.constant 1 : index
    %c0_46 = arith.constant 0 : index
    %c0_47 = arith.constant 0 : index
    %c0_48 = arith.constant 0 : index
    %53 = vector.load %arg6[%c1_45, %c0_46, %c0_47, %c0_48] : memref<3x3x8x4xbf16, #tpu.memory_space<vmem>>, vector<1x1x8x4xbf16>
    %54 = vector.shape_cast %53 : vector<1x1x8x4xbf16> to vector<8x4xbf16>
    %cst_49 = arith.constant dense<0.000000e+00> : vector<256x4xf32>
    %55 = tpu.matmul %52, %54, %cst_49 {dimension_numbers = #tpu.dot_dimension_numbers<[1], [0], [0], [1], [0, 0, 1, 1], [], []>} : vector<256x8xbf16>, vector<8x4xbf16>, vector<256x4xf32> -> vector<256x4xf32>
    %56 = arith.addf %49, %55 : vector<256x4xf32>
    %c1_50 = arith.constant 1 : index
    %c1_51 = arith.constant 1 : index
    %c0_52 = arith.constant 0 : index
    %57 = vector.load %arg8[%c1_50, %c1_51, %c0_52] : memref<18x18x8xf32, #tpu.memory_space<vmem>>, vector<16x16x8xf32>
    %58 = vector.shape_cast %57 : vector<16x16x8xf32> to vector<256x8xf32>
    %59 = arith.truncf %58 : vector<256x8xf32> to vector<256x8xbf16>
    %c1_53 = arith.constant 1 : index
    %c1_54 = arith.constant 1 : index
    %c0_55 = arith.constant 0 : index
    %c0_56 = arith.constant 0 : index
    %60 = vector.load %arg6[%c1_53, %c1_54, %c0_55, %c0_56] : memref<3x3x8x4xbf16, #tpu.memory_space<vmem>>, vector<1x1x8x4xbf16>
    %61 = vector.shape_cast %60 : vector<1x1x8x4xbf16> to vector<8x4xbf16>
    %cst_57 = arith.constant dense<0.000000e+00> : vector<256x4xf32>
    %62 = tpu.matmul %59, %61, %cst_57 {dimension_numbers = #tpu.dot_dimension_numbers<[1], [0], [0], [1], [0, 0, 1, 1], [], []>} : vector<256x8xbf16>, vector<8x4xbf16>, vector<256x4xf32> -> vector<256x4xf32>
    %63 = arith.addf %56, %62 : vector<256x4xf32>
    %c1_58 = arith.constant 1 : index
    %c2_59 = arith.constant 2 : index
    %c0_60 = arith.constant 0 : index
    %64 = vector.load %arg8[%c1_58, %c2_59, %c0_60] : memref<18x18x8xf32, #tpu.memory_space<vmem>>, vector<16x16x8xf32>
    %65 = vector.shape_cast %64 : vector<16x16x8xf32> to vector<256x8xf32>
    %66 = arith.truncf %65 : vector<256x8xf32> to vector<256x8xbf16>
    %c1_61 = arith.constant 1 : index
    %c2_62 = arith.constant 2 : index
    %c0_63 = arith.constant 0 : index
    %c0_64 = arith.constant 0 : index
    %67 = vector.load %arg6[%c1_61, %c2_62, %c0_63, %c0_64] : memref<3x3x8x4xbf16, #tpu.memory_space<vmem>>, vector<1x1x8x4xbf16>
    %68 = vector.shape_cast %67 : vector<1x1x8x4xbf16> to vector<8x4xbf16>
    %cst_65 = arith.constant dense<0.000000e+00> : vector<256x4xf32>
    %69 = tpu.matmul %66, %68, %cst_65 {dimension_numbers = #tpu.dot_dimension_numbers<[1], [0], [0], [1], [0, 0, 1, 1], [], []>} : vector<256x8xbf16>, vector<8x4xbf16>, vector<256x4xf32> -> vector<256x4xf32>
    %70 = arith.addf %63, %69 : vector<256x4xf32>
    %c2_66 = arith.constant 2 : index
    %c0_67 = arith.constant 0 : index
    %c0_68 = arith.constant 0 : index
    %71 = vector.load %arg8[%c2_66, %c0_67, %c0_68] : memref<18x18x8xf32, #tpu.memory_space<vmem>>, vector<16x16x8xf32>
    %72 = vector.shape_cast %71 : vector<16x16x8xf32> to vector<256x8xf32>
    %73 = arith.truncf %72 : vector<256x8xf32> to vector<256x8xbf16>
    %c2_69 = arith.constant 2 : index
    %c0_70 = arith.constant 0 : index
    %c0_71 = arith.constant 0 : index
    %c0_72 = arith.constant 0 : index
    %74 = vector.load %arg6[%c2_69, %c0_70, %c0_71, %c0_72] : memref<3x3x8x4xbf16, #tpu.memory_space<vmem>>, vector<1x1x8x4xbf16>
    %75 = vector.shape_cast %74 : vector<1x1x8x4xbf16> to vector<8x4xbf16>
    %cst_73 = arith.constant dense<0.000000e+00> : vector<256x4xf32>
    %76 = tpu.matmul %73, %75, %cst_73 {dimension_numbers = #tpu.dot_dimension_numbers<[1], [0], [0], [1], [0, 0, 1, 1], [], []>} : vector<256x8xbf16>, vector<8x4xbf16>, vector<256x4xf32> -> vector<256x4xf32>
    %77 = arith.addf %70, %76 : vector<256x4xf32>
    %c2_74 = arith.constant 2 : index
    %c1_75 = arith.constant 1 : index
    %c0_76 = arith.constant 0 : index
    %78 = vector.load %arg8[%c2_74, %c1_75, %c0_76] : memref<18x18x8xf32, #tpu.memory_space<vmem>>, vector<16x16x8xf32>
    %79 = vector.shape_cast %78 : vector<16x16x8xf32> to vector<256x8xf32>
    %80 = arith.truncf %79 : vector<256x8xf32> to vector<256x8xbf16>
    %c2_77 = arith.constant 2 : index
    %c1_78 = arith.constant 1 : index
    %c0_79 = arith.constant 0 : index
    %c0_80 = arith.constant 0 : index
    %81 = vector.load %arg6[%c2_77, %c1_78, %c0_79, %c0_80] : memref<3x3x8x4xbf16, #tpu.memory_space<vmem>>, vector<1x1x8x4xbf16>
    %82 = vector.shape_cast %81 : vector<1x1x8x4xbf16> to vector<8x4xbf16>
    %cst_81 = arith.constant dense<0.000000e+00> : vector<256x4xf32>
    %83 = tpu.matmul %80, %82, %cst_81 {dimension_numbers = #tpu.dot_dimension_numbers<[1], [0], [0], [1], [0, 0, 1, 1], [], []>} : vector<256x8xbf16>, vector<8x4xbf16>, vector<256x4xf32> -> vector<256x4xf32>
    %84 = arith.addf %77, %83 : vector<256x4xf32>
    %c2_82 = arith.constant 2 : index
    %c2_83 = arith.constant 2 : index
    %c0_84 = arith.constant 0 : index
    %85 = vector.load %arg8[%c2_82, %c2_83, %c0_84] : memref<18x18x8xf32, #tpu.memory_space<vmem>>, vector<16x16x8xf32>
    %86 = vector.shape_cast %85 : vector<16x16x8xf32> to vector<256x8xf32>
    %87 = arith.truncf %86 : vector<256x8xf32> to vector<256x8xbf16>
    %c2_85 = arith.constant 2 : index
    %c2_86 = arith.constant 2 : index
    %c0_87 = arith.constant 0 : index
    %c0_88 = arith.constant 0 : index
    %88 = vector.load %arg6[%c2_85, %c2_86, %c0_87, %c0_88] : memref<3x3x8x4xbf16, #tpu.memory_space<vmem>>, vector<1x1x8x4xbf16>
    %89 = vector.shape_cast %88 : vector<1x1x8x4xbf16> to vector<8x4xbf16>
    %cst_89 = arith.constant dense<0.000000e+00> : vector<256x4xf32>
    %90 = tpu.matmul %87, %89, %cst_89 {dimension_numbers = #tpu.dot_dimension_numbers<[1], [0], [0], [1], [0, 0, 1, 1], [], []>} : vector<256x8xbf16>, vector<8x4xbf16>, vector<256x4xf32> -> vector<256x4xf32>
    %91 = arith.addf %84, %90 : vector<256x4xf32>
    %c0_90 = arith.constant 0 : index
    %c0_91 = arith.constant 0 : index
    %c0_92 = arith.constant 0 : index
    %92 = vector.load %arg7[%c0_90, %c0_91, %c0_92] : memref<1x256x4xf32, #tpu.memory_space<vmem>>, vector<1x256x4xf32>
    %93 = vector.shape_cast %92 : vector<1x256x4xf32> to vector<256x4xf32>
    %94 = vector.shape_cast %91 : vector<256x4xf32> to vector<1x256x4xf32>
    tpu.vector_store %arg7[%c0_90, %c0_91, %c0_92], %94 {strides = array<i32>} : memref<1x256x4xf32, #tpu.memory_space<vmem>>, vector<1x256x4xf32>,
    return
  }
  func.func @transform_0(%arg0: i32) -> (i32, i32, i32) {
    %c0_i32 = arith.constant 0 : i32
    %c0_i32_0 = arith.constant 0 : i32
    %c0_i32_1 = arith.constant 0 : i32
    return %arg0, %c0_i32, %c0_i32_0 : i32, i32, i32
  }
  func.func @transform_1(%arg0: i32) -> (i32, i32) {
    %c0_i32 = arith.constant 0 : i32
    %c0_i32_0 = arith.constant 0 : i32
    %c0_i32_1 = arith.constant 0 : i32
    return %c0_i32, %c0_i32_0 : i32, i32
  }
  func.func @transform_2(%arg0: i32) -> (i32, i32) {
    %c0_i32 = arith.constant 0 : i32
    %c0_i32_0 = arith.constant 0 : i32
    %c0_i32_1 = arith.constant 0 : i32
    return %c0_i32, %c0_i32_0 : i32, i32
  }
  func.func @transform_3(%arg0: i32) -> (i32, i32) {
    %c0_i32 = arith.constant 0 : i32
    %c0_i32_0 = arith.constant 0 : i32
    %c0_i32_1 = arith.constant 0 : i32
    return %c0_i32, %c0_i32_0 : i32, i32
  }
  func.func @transform_4(%arg0: i32) -> (i32, i32) {
    %c0_i32 = arith.constant 0 : i32
    %c0_i32_0 = arith.constant 0 : i32
    %c0_i32_1 = arith.constant 0 : i32
    return %c0_i32, %c0_i32_0 : i32, i32
  }
  func.func @transform_5(%arg0: i32) -> (i32, i32, i32, i32) {
    %c0_i32 = arith.constant 0 : i32
    %c0_i32_0 = arith.constant 0 : i32
    %c0_i32_1 = arith.constant 0 : i32
    %c0_i32_2 = arith.constant 0 : i32
    %c0_i32_3 = arith.constant 0 : i32
    return %c0_i32, %c0_i32_0, %c0_i32_1, %c0_i32_2 : i32, i32, i32, i32
  }
  func.func @transform_6(%arg0: i32) -> (i32, i32, i32) {
    %c0_i32 = arith.constant 0 : i32
    %c0_i32_0 = arith.constant 0 : i32
    %c0_i32_1 = arith.constant 0 : i32
    return %arg0, %c0_i32, %c0_i32_0 : i32, i32, i32
  }
}

</mosaic_0001>

<llo_original>
// kernel: tpu_custom_call.1
$region0: #{tpu_custom_call.1}
  #allocation0 [shape = 'u32[]', space=smem, size = 0x4, offset = 0x4, fixed_abs, tag = 'smem constant byte address 0x4 - core index']
  #allocation1 [shape = 'u32[72,128]{1,0:T(1,128)}', space=vmem, size = 0x9000, scoped, tag = 'internal scratch']
  #allocation2 [shape = 'f32[18,18,8]{2,1,0:T(8,128)}', space=vmem, size = 0x36000, scoped, tag = 'scratch operand']
  %s0 = inlined_call_operand.vmem [shape: f32[2,256,8], index: 0, kind: input, shape index: {}]
  %s1 = inlined_call_operand.vmem [shape: f32[1,8], index: 1, kind: input, shape index: {}]
  %s2 = inlined_call_operand.vmem [shape: f32[1,8], index: 2, kind: input, shape index: {}]
  %s3 = inlined_call_operand.vmem [shape: bf16[8,8], index: 3, kind: input, shape index: {}]
  %s4 = inlined_call_operand.vmem [shape: f32[1,8], index: 4, kind: input, shape index: {}]
  %s5 = inlined_call_operand.vmem [shape: bf16[3,3,8,4], index: 5, kind: input, shape index: {}]
  %s6 = inlined_call_operand.vmem [shape: f32[2,256,4], index: 6, kind: output, shape index: {}]
  %s7 = sld [smem:[#allocation0]]
  $region57: #{tpu_custom_call.1} parent=0
    _
  %s9 = ssub.s32 1, %s7
  %s10 = scalar_select 0, %s9, %s7
  loop: start=0, step=1, limit=4
  $region2: #{tpu_custom_call.1} parent=0 // loop_pre_header
    _
  $region3: #{tpu_custom_call.1} parent=0 // loop_header
    %s12 = sphi 0, %s16
    %p13 = scmp.ge.s32.totalorder %s12, 4
    %s22 = sphi 0, %s24
    %s25 = sphi 0, %s22
    %s26 = sphi 0, %s25
    %s42 = sphi 0, %s26
    %s46 = sphi 0, %s46
    %s48 = sphi 0, %s46
    %s49 = sphi 0, %s48
    %s63 = sphi 0, %s49
    %s67 = sphi 0, %s67
    %s69 = sphi 0, %s67
    %s70 = sphi 0, %s69
    %s84 = sphi 0, %s70
    %s88 = sphi 0, %s88
    %s90 = sphi 0, %s88
    %s91 = sphi 0, %s90
    %s105 = sphi 0, %s91
    %s109 = sphi 0, %s109
    %s111 = sphi 0, %s109
    %s112 = sphi 0, %s111
    %s126 = sphi 0, %s112
    %s130 = sphi 0, %s130
    %s132 = sphi 0, %s130
    %s133 = sphi 0, %s132
    %s147 = sphi 0, %s133
    %s153 = sphi 0, %s155
    %s156 = sphi 0, %s153
    %s157 = sphi 0, %s156
    %s173 = sphi 0, %s157
  $region4: #{tpu_custom_call.1} parent=0 // loop_header_branch
    %15 = sbr.rel (%p13) target = $region8
  $region5: #{tpu_custom_call.1} parent=0 // loop_body
    %s17 = ssub.s32 %s12, 1
    %s18 = ssub.s32 %s12, 2
    %s19 = sadd.s32 %s12, 1
    %s20 = ssub.s32 %s12, %s19
    %p21 = scmp.eq.s32.totalorder %s20, 0
    %s23 = sadd.s32 %s22, 1
    %s24 = scalar_select %p21, %s22, %s23
    %p27 = pneg %p21
    %p28 = scmp.eq.s32.totalorder %s12, 1
    %p29 = por %p27, %p28
    %p30 = scmp.ne.s32.totalorder %s22, %s25
    %p31 = scmp.eq.s32.totalorder %s12, 0
    %p32 = por %p30, %p31
    %p33 = scmp.ne.s32.totalorder %s22, %s25
    %p34 = scmp.eq.s32.totalorder %s17, 1
    %p35 = por %p33, %p34
    %p36 = scmp.ne.s32.totalorder %s25, %s26
    %p37 = scmp.eq.s32.totalorder %s17, 0
    %p38 = por %p36, %p37
    %p39 = scmp.ne.s32.totalorder %s25, %s26
    %p40 = scmp.eq.s32.totalorder %s18, 1
    %p41 = por %p39, %p40
    %p43 = scmp.ne.s32.totalorder %s26, %s42
    %p44 = scmp.eq.s32.totalorder %s18, 0
    %p45 = por %p43, %p44
    %s47 = sadd.s32 %s46, 1
    %p50 = scmp.eq.s32.totalorder %s12, 1
    %p51 = scmp.ne.s32.totalorder %s46, %s48
    %p52 = scmp.eq.s32.totalorder %s12, 0
    %p53 = por %p51, %p52
    %p54 = scmp.ne.s32.totalorder %s46, %s48
    %p55 = scmp.eq.s32.totalorder %s17, 1
    %p56 = por %p54, %p55
    %p57 = scmp.ne.s32.totalorder %s48, %s49
    %p58 = scmp.eq.s32.totalorder %s17, 0
    %p59 = por %p57, %p58
    %p60 = scmp.ne.s32.totalorder %s48, %s49
    %p61 = scmp.eq.s32.totalorder %s18, 1
    %p62 = por %p60, %p61
    %p64 = scmp.ne.s32.totalorder %s49, %s63
    %p65 = scmp.eq.s32.totalorder %s18, 0
    %p66 = por %p64, %p65
    %s68 = sadd.s32 %s67, 1
    %p71 = scmp.eq.s32.totalorder %s12, 1
    %p72 = scmp.ne.s32.totalorder %s67, %s69
    %p73 = scmp.eq.s32.totalorder %s12, 0
    %p74 = por %p72, %p73
    %p75 = scmp.ne.s32.totalorder %s67, %s69
    %p76 = scmp.eq.s32.totalorder %s17, 1
    %p77 = por %p75, %p76
    %p78 = scmp.ne.s32.totalorder %s69, %s70
    %p79 = scmp.eq.s32.totalorder %s17, 0
    %p80 = por %p78, %p79
    %p81 = scmp.ne.s32.totalorder %s69, %s70
    %p82 = scmp.eq.s32.totalorder %s18, 1
    %p83 = por %p81, %p82
    %p85 = scmp.ne.s32.totalorder %s70, %s84
    %p86 = scmp.eq.s32.totalorder %s18, 0
    %p87 = por %p85, %p86
    %s89 = sadd.s32 %s88, 1
    %p92 = scmp.eq.s32.totalorder %s12, 1
    %p93 = scmp.ne.s32.totalorder %s88, %s90
    %p94 = scmp.eq.s32.totalorder %s12, 0
    %p95 = por %p93, %p94
    %p96 = scmp.ne.s32.totalorder %s88, %s90
    %p97 = scmp.eq.s32.totalorder %s17, 1
    %p98 = por %p96, %p97
    %p99 = scmp.ne.s32.totalorder %s90, %s91
    %p100 = scmp.eq.s32.totalorder %s17, 0
    %p101 = por %p99, %p100
    %p102 = scmp.ne.s32.totalorder %s90, %s91
    %p103 = scmp.eq.s32.totalorder %s18, 1
    %p104 = por %p102, %p103
    %p106 = scmp.ne.s32.totalorder %s91, %s105
    %p107 = scmp.eq.s32.totalorder %s18, 0
    %p108 = por %p106, %p107
    %s110 = sadd.s32 %s109, 1
    %p113 = scmp.eq.s32.totalorder %s12, 1
    %p114 = scmp.ne.s32.totalorder %s109, %s111
    %p115 = scmp.eq.s32.totalorder %s12, 0
    %p116 = por %p114, %p115
    %p117 = scmp.ne.s32.totalorder %s109, %s111
    %p118 = scmp.eq.s32.totalorder %s17, 1
    %p119 = por %p117, %p118
    %p120 = scmp.ne.s32.totalorder %s111, %s112
    %p121 = scmp.eq.s32.totalorder %s17, 0
    %p122 = por %p120, %p121
    %p123 = scmp.ne.s32.totalorder %s111, %s112
    %p124 = scmp.eq.s32.totalorder %s18, 1
    %p125 = por %p123, %p124
    %p127 = scmp.ne.s32.totalorder %s112, %s126
    %p128 = scmp.eq.s32.totalorder %s18, 0
    %p129 = por %p127, %p128
    %s131 = sadd.s32 %s130, 1
    %p134 = scmp.eq.s32.totalorder %s12, 1
    %p135 = scmp.ne.s32.totalorder %s130, %s132
    %p136 = scmp.eq.s32.totalorder %s12, 0
    %p137 = por %p135, %p136
    %p138 = scmp.ne.s32.totalorder %s130, %s132
    %p139 = scmp.eq.s32.totalorder %s17, 1
    %p140 = por %p138, %p139
    %p141 = scmp.ne.s32.totalorder %s132, %s133
    %p142 = scmp.eq.s32.totalorder %s17, 0
    %p143 = por %p141, %p142
    %p144 = scmp.ne.s32.totalorder %s132, %s133
    %p145 = scmp.eq.s32.totalorder %s18, 1
    %p146 = por %p144, %p145
    %p148 = scmp.ne.s32.totalorder %s133, %s147
    %p149 = scmp.eq.s32.totalorder %s18, 0
    %p150 = por %p148, %p149
    %s151 = ssub.s32 %s12, %s19
    %p152 = scmp.eq.s32.totalorder %s151, 0
    %s154 = sadd.s32 %s153, 1
    %s155 = scalar_select %p152, %s153, %s154
    %p158 = pneg %p152
    %p159 = scmp.eq.s32.totalorder %s12, 1
    %p160 = por %p158, %p159
    %p161 = scmp.ne.s32.totalorder %s153, %s156
    %p162 = scmp.eq.s32.totalorder %s12, 0
    %p163 = por %p161, %p162
    %p164 = scmp.ne.s32.totalorder %s153, %s156
    %p165 = scmp.eq.s32.totalorder %s17, 1
    %p166 = por %p164, %p165
    %p167 = scmp.ne.s32.totalorder %s156, %s157
    %p168 = scmp.eq.s32.totalorder %s17, 0
    %p169 = por %p167, %p168
    %p170 = scmp.ne.s32.totalorder %s156, %s157
    %p171 = scmp.eq.s32.totalorder %s18, 1
    %p172 = por %p170, %p171
    %p174 = scmp.ne.s32.totalorder %s157, %s173
    %p175 = scmp.eq.s32.totalorder %s18, 0
    %p176 = por %p174, %p175
    %p177 = scmp.le.s32.totalorder 1, %s12
    %p178 = scmp.lt.s32.totalorder %s12, 3
    %p179 = pnand %p177, %p178
    %p180 = pneg %p179
    // Predicated region
    $region9: #{tpu_custom_call.1} parent=5 // pred_check
      _
    $region10: #{tpu_custom_call.1} parent=5 // pred_check_branch
      %182 = sbr.rel (%p179) target = $region12
    $region11: #{tpu_custom_call.1} parent=5 // pred_region
      %s183 = ssub.s32 %s12, 1
      // Predicated region
      $region13: #{tpu_custom_call.1} parent=11 // pred_check
        %p184 = pneg %p59
      $region14: #{tpu_custom_call.1} parent=11 // pred_check_branch
        %186 = sbr.rel (%p184) target = $region16
      $region15: #{tpu_custom_call.1} parent=11 // pred_region
        _
      $region16: #{tpu_custom_call.1} parent=11 // pred_fallthru
        _
      // Predicated region
      $region17: #{tpu_custom_call.1} parent=11 // pred_check
        %p187 = pneg %p80
      $region18: #{tpu_custom_call.1} parent=11 // pred_check_branch
        %189 = sbr.rel (%p187) target = $region20
      $region19: #{tpu_custom_call.1} parent=11 // pred_region
        _
      $region20: #{tpu_custom_call.1} parent=11 // pred_fallthru
        _
      // Predicated region
      $region21: #{tpu_custom_call.1} parent=11 // pred_check
        %p190 = pneg %p101
      $region22: #{tpu_custom_call.1} parent=11 // pred_check_branch
        %192 = sbr.rel (%p190) target = $region24
      $region23: #{tpu_custom_call.1} parent=11 // pred_region
        _
      $region24: #{tpu_custom_call.1} parent=11 // pred_fallthru
        _
      // Predicated region
      $region25: #{tpu_custom_call.1} parent=11 // pred_check
        %p193 = pneg %p122
      $region26: #{tpu_custom_call.1} parent=11 // pred_check_branch
        %195 = sbr.rel (%p193) target = $region28
      $region27: #{tpu_custom_call.1} parent=11 // pred_region
        _
      $region28: #{tpu_custom_call.1} parent=11 // pred_fallthru
        _
      // Predicated region
      $region29: #{tpu_custom_call.1} parent=11 // pred_check
        %p196 = pneg %p143
      $region30: #{tpu_custom_call.1} parent=11 // pred_check_branch
        %198 = sbr.rel (%p196) target = $region32
      $region31: #{tpu_custom_call.1} parent=11 // pred_region
        _
      $region32: #{tpu_custom_call.1} parent=11 // pred_fallthru
        _
    $region12: #{tpu_custom_call.1} parent=5 // pred_fallthru
      _
    %p199 = scmp.lt.s32.totalorder %s12, 2
    // Predicated region
    $region33: #{tpu_custom_call.1} parent=5 // pred_check
      %p200 = pneg %p199
    $region34: #{tpu_custom_call.1} parent=5 // pred_check_branch
      %202 = sbr.rel (%p200) target = $region36
    $region35: #{tpu_custom_call.1} parent=5 // pred_region
      // Predicated region
      $region37: #{tpu_custom_call.1} parent=35 // pred_check
        %p203 = pneg %p32
      $region38: #{tpu_custom_call.1} parent=35 // pred_check_branch
        %205 = sbr.rel (%p203) target = $region40
      $region39: #{tpu_custom_call.1} parent=35 // pred_region
        %p206 = scmp.lt.s32.totalorder %s12, 1
        %s207 = scalar_select %p206, %s12, 1
        %s208 = smul.addr %s207, 32
        %s209 = smul.addr %s208, 8
        %s210 = scalar_lea.vmem %s0, %s209
      $region40: #{tpu_custom_call.1} parent=35 // pred_fallthru
        _
    $region36: #{tpu_custom_call.1} parent=5 // pred_fallthru
      _
    %p211 = scmp.le.s32.totalorder 1, %s12
    %p212 = scmp.lt.s32.totalorder %s12, 3
    %p213 = pnand %p211, %p212
    %p214 = pneg %p213
    // Predicated region
    $region41: #{tpu_custom_call.1} parent=5 // pred_check
      _
    $region42: #{tpu_custom_call.1} parent=5 // pred_check_branch
      %216 = sbr.rel (%p213) target = $region44
    $region43: #{tpu_custom_call.1} parent=5 // pred_region
      %s217 = ssub.s32 %s12, 1
      %p218 = scmp.lt.s32.totalorder %s17, 1
      %s219 = scalar_select %p218, %s17, 1
      %s220 = smul.addr %s219, 32
      %s221 = smul.addr %s220, 8
      %s222 = scalar_lea.vmem %s0, %s221
      %p223 = pneg %p38
      %p224 = pneg %p35
      %p225 = pneg %p59
      %p226 = pneg %p56
      %p227 = pneg %p80
      %p228 = pneg %p77
      %p229 = pneg %p101
      %p230 = pneg %p98
      %p231 = pneg %p122
      %p232 = pneg %p119
      %p233 = pneg %p143
      %p234 = pneg %p140
      %p235 = pneg %p169
      %p236 = pneg %p166
      %p237 = scmp.lt.s32.totalorder %s17, 1
      %s238 = scalar_select %p237, %s17, 1
      %s239 = smul.addr %s238, 32
      %s240 = smul.addr %s239, 8
      %s241 = scalar_lea.vmem %s6, %s240
      %p242 = scmp.lt.s32.totalorder %s17, 1
      %s243 = scalar_select %p242, %s17, 1
      %s244 = smul.addr %s243, 32
      %s245 = smul.addr %s244, 8
      %s246 = scalar_lea.vmem %s0, %s245
      %p247 = scmp.lt.s32.totalorder %s17, 1
      %s248 = scalar_select %p247, %s17, 1
      %s249 = smul.addr %s248, 32
      %s250 = smul.addr %s249, 8
      %s251 = scalar_lea.vmem %s6, %s250
      %v253 = vld [vmem:[%s246] sm:$0xff]
      %v254 = vld [vmem:[%s246 + $0x8] sm:$0xff]
      %v255 = vld [vmem:[%s246 + $0x10] sm:$0xff]
      %v256 = vld [vmem:[%s246 + $0x18] sm:$0xff]
      %v257 = vld [vmem:[%s246 + $0x20] sm:$0xff]
      %v258 = vld [vmem:[%s246 + $0x28] sm:$0xff]
      %v259 = vld [vmem:[%s246 + $0x30] sm:$0xff]
      %v260 = vld [vmem:[%s246 + $0x38] sm:$0xff]
      %v261 = vld [vmem:[%s246 + $0x40] sm:$0xff]
      %v262 = vld [vmem:[%s246 + $0x48] sm:$0xff]
      %v263 = vld [vmem:[%s246 + $0x50] sm:$0xff]
      %v264 = vld [vmem:[%s246 + $0x58] sm:$0xff]
      %v265 = vld [vmem:[%s246 + $0x60] sm:$0xff]
      %v266 = vld [vmem:[%s246 + $0x68] sm:$0xff]
      %v267 = vld [vmem:[%s246 + $0x70] sm:$0xff]
      %v268 = vld [vmem:[%s246 + $0x78] sm:$0xff]
      %v269 = vld [vmem:[%s246 + $0x80] sm:$0xff]
      %v270 = vld [vmem:[%s246 + $0x88] sm:$0xff]
      %v271 = vld [vmem:[%s246 + $0x90] sm:$0xff]
      %v272 = vld [vmem:[%s246 + $0x98] sm:$0xff]
      %v273 = vld [vmem:[%s246 + $0xa0] sm:$0xff]
      %v274 = vld [vmem:[%s246 + $0xa8] sm:$0xff]
      %v275 = vld [vmem:[%s246 + $0xb0] sm:$0xff]
      %v276 = vld [vmem:[%s246 + $0xb8] sm:$0xff]
      %v277 = vld [vmem:[%s246 + $0xc0] sm:$0xff]
      %v278 = vld [vmem:[%s246 + $0xc8] sm:$0xff]
      %v279 = vld [vmem:[%s246 + $0xd0] sm:$0xff]
      %v280 = vld [vmem:[%s246 + $0xd8] sm:$0xff]
      %v281 = vld [vmem:[%s246 + $0xe0] sm:$0xff]
      %v282 = vld [vmem:[%s246 + $0xe8] sm:$0xff]
      %v283 = vld [vmem:[%s246 + $0xf0] sm:$0xff]
      %v284 = vld [vmem:[%s246 + $0xf8] sm:$0xff]
      %v285 = vld [vmem:[%s1] sm:$0x1]
      %v287 = vperm.slane %v285, 0
      %v289 = vmul.f32 %v253, %v287
      %v290 = vmul.f32 %v254, %v287
      %v291 = vmul.f32 %v255, %v287
      %v292 = vmul.f32 %v256, %v287
      %v293 = vmul.f32 %v257, %v287
      %v294 = vmul.f32 %v258, %v287
      %v295 = vmul.f32 %v259, %v287
      %v296 = vmul.f32 %v260, %v287
      %v297 = vmul.f32 %v261, %v287
      %v298 = vmul.f32 %v262, %v287
      %v299 = vmul.f32 %v263, %v287
      %v300 = vmul.f32 %v264, %v287
      %v301 = vmul.f32 %v265, %v287
      %v302 = vmul.f32 %v266, %v287
      %v303 = vmul.f32 %v267, %v287
      %v304 = vmul.f32 %v268, %v287
      %v305 = vmul.f32 %v269, %v287
      %v306 = vmul.f32 %v270, %v287
      %v307 = vmul.f32 %v271, %v287
      %v308 = vmul.f32 %v272, %v287
      %v309 = vmul.f32 %v273, %v287
      %v310 = vmul.f32 %v274, %v287
      %v311 = vmul.f32 %v275, %v287
      %v312 = vmul.f32 %v276, %v287
      %v313 = vmul.f32 %v277, %v287
      %v314 = vmul.f32 %v278, %v287
      %v315 = vmul.f32 %v279, %v287
      %v316 = vmul.f32 %v280, %v287
      %v317 = vmul.f32 %v281, %v287
      %v318 = vmul.f32 %v282, %v287
      %v319 = vmul.f32 %v283, %v287
      %v320 = vmul.f32 %v284, %v287
      %v321 = vld [vmem:[%s2] sm:$0x1]
      %v323 = vperm.slane %v321, 0
      %v325 = vadd.f32 %v289, %v323
      %v326 = vadd.f32 %v290, %v323
      %v327 = vadd.f32 %v291, %v323
      %v328 = vadd.f32 %v292, %v323
      %v329 = vadd.f32 %v293, %v323
      %v330 = vadd.f32 %v294, %v323
      %v331 = vadd.f32 %v295, %v323
      %v332 = vadd.f32 %v296, %v323
      %v333 = vadd.f32 %v297, %v323
      %v334 = vadd.f32 %v298, %v323
      %v335 = vadd.f32 %v299, %v323
      %v336 = vadd.f32 %v300, %v323
      %v337 = vadd.f32 %v301, %v323
      %v338 = vadd.f32 %v302, %v323
      %v339 = vadd.f32 %v303, %v323
      %v340 = vadd.f32 %v304, %v323
      %v341 = vadd.f32 %v305, %v323
      %v342 = vadd.f32 %v306, %v323
      %v343 = vadd.f32 %v307, %v323
      %v344 = vadd.f32 %v308, %v323
      %v345 = vadd.f32 %v309, %v323
      %v346 = vadd.f32 %v310, %v323
      %v347 = vadd.f32 %v311, %v323
      %v348 = vadd.f32 %v312, %v323
      %v349 = vadd.f32 %v313, %v323
      %v350 = vadd.f32 %v314, %v323
      %v351 = vadd.f32 %v315, %v323
      %v352 = vadd.f32 %v316, %v323
      %v353 = vadd.f32 %v317, %v323
      %v354 = vadd.f32 %v318, %v323
      %v355 = vadd.f32 %v319, %v323
      %v356 = vadd.f32 %v320, %v323
      %v357 = vmax.f32 %v325, 0.0
      %v358 = vmax.f32 %v326, 0.0
      %v359 = vmax.f32 %v327, 0.0
      %v360 = vmax.f32 %v328, 0.0
      %v361 = vmax.f32 %v329, 0.0
      %v362 = vmax.f32 %v330, 0.0
      %v363 = vmax.f32 %v331, 0.0
      %v364 = vmax.f32 %v332, 0.0
      %v365 = vmax.f32 %v333, 0.0
      %v366 = vmax.f32 %v334, 0.0
      %v367 = vmax.f32 %v335, 0.0
      %v368 = vmax.f32 %v336, 0.0
      %v369 = vmax.f32 %v337, 0.0
      %v370 = vmax.f32 %v338, 0.0
      %v371 = vmax.f32 %v339, 0.0
      %v372 = vmax.f32 %v340, 0.0
      %v373 = vmax.f32 %v341, 0.0
      %v374 = vmax.f32 %v342, 0.0
      %v375 = vmax.f32 %v343, 0.0
      %v376 = vmax.f32 %v344, 0.0
      %v377 = vmax.f32 %v345, 0.0
      %v378 = vmax.f32 %v346, 0.0
      %v379 = vmax.f32 %v347, 0.0
      %v380 = vmax.f32 %v348, 0.0
      %v381 = vmax.f32 %v349, 0.0
      %v382 = vmax.f32 %v350, 0.0
      %v383 = vmax.f32 %v351, 0.0
      %v384 = vmax.f32 %v352, 0.0
      %v385 = vmax.f32 %v353, 0.0
      %v386 = vmax.f32 %v354, 0.0
      %v387 = vmax.f32 %v355, 0.0
      %v388 = vmax.f32 %v356, 0.0
      %v389 = vpack.c.bf16 %v358, %v357
      %v390 = vpack.c.bf16 %v360, %v359
      %v391 = vpack.c.bf16 %v362, %v361
      %v392 = vpack.c.bf16 %v364, %v363
      %v393 = vpack.c.bf16 %v366, %v365
      %v394 = vpack.c.bf16 %v368, %v367
      %v395 = vpack.c.bf16 %v370, %v369
      %v396 = vpack.c.bf16 %v372, %v371
      %v397 = vpack.c.bf16 %v374, %v373
      %v398 = vpack.c.bf16 %v376, %v375
      %v399 = vpack.c.bf16 %v378, %v377
      %v400 = vpack.c.bf16 %v380, %v379
      %v401 = vpack.c.bf16 %v382, %v381
      %v402 = vpack.c.bf16 %v384, %v383
      %v403 = vpack.c.bf16 %v386, %v385
      %v404 = vpack.c.bf16 %v388, %v387
      %v405 = vld [vmem:[%s3] sm:$0xf]
      %v406 = vld [vmem:[%s4] sm:$0x1]
      %v408 = vperm.slane %v406, 0
      %vm410 = vcmask 64512
      %v412 = vsel %vm410, %v389, 0
      %v415 = vsel %vm410, %v390, 0
      %v418 = vsel %vm410, %v391, 0
      %v421 = vsel %vm410, %v392, 0
      %v424 = vsel %vm410, %v393, 0
      %v427 = vsel %vm410, %v394, 0
      %v430 = vsel %vm410, %v395, 0
      %v433 = vsel %vm410, %v396, 0
      %v436 = vsel %vm410, %v397, 0
      %v439 = vsel %vm410, %v398, 0
      %v442 = vsel %vm410, %v399, 0
      %v445 = vsel %vm410, %v400, 0
      %v448 = vsel %vm410, %v401, 0
      %v451 = vsel %vm410, %v402, 0
      %v454 = vsel %vm410, %v403, 0
      %v457 = vsel %vm410, %v404, 0
      %vm459 = vcmask 1043456
      %v461 = vsel %vm459, %v405, 0
      %463 = vmatpush.bf16.msra.mxu0 0
      %464 = vmatpush.bf16.msra.mxu0 0
      %465 = vmatpush.bf16.msra.mxu0 0
      %466 = vmatpush.bf16.msra.mxu0 0
      %467 = vmatpush.bf16.msra.mxu0 0
      %468 = vmatpush.bf16.msra.mxu0 0
      %469 = vmatpush.bf16.msra.mxu0 0
      %470 = vmatpush.bf16.msra.mxu0 %v461
      %471 = vmatmul.bf16.gmra.mxu0 %v412
      %v472 = vpop.f32.mrf.mxu0
      %v473 = vadd.f32 %v408, %v472
      %v474 = vpop.f32.mrf.mxu0
      %v475 = vadd.f32 %v408, %v474
      %476 = vmatmul.bf16.gmra.mxu0 %v415
      %v477 = vpop.f32.mrf.mxu0
      %v478 = vadd.f32 %v408, %v477
      %v479 = vpop.f32.mrf.mxu0
      %v480 = vadd.f32 %v408, %v479
      %481 = vmatmul.bf16.gmra.mxu0 %v418
      %v482 = vpop.f32.mrf.mxu0
      %v483 = vadd.f32 %v408, %v482
      %v484 = vpop.f32.mrf.mxu0
      %v485 = vadd.f32 %v408, %v484
      %486 = vmatmul.bf16.gmra.mxu0 %v421
      %v487 = vpop.f32.mrf.mxu0
      %v488 = vadd.f32 %v408, %v487
      %v489 = vpop.f32.mrf.mxu0
      %v490 = vadd.f32 %v408, %v489
      %491 = vmatmul.bf16.gmra.mxu0 %v424
      %v492 = vpop.f32.mrf.mxu0
      %v493 = vadd.f32 %v408, %v492
      %v494 = vpop.f32.mrf.mxu0
      %v495 = vadd.f32 %v408, %v494
      %496 = vmatmul.bf16.gmra.mxu0 %v427
      %v497 = vpop.f32.mrf.mxu0
      %v498 = vadd.f32 %v408, %v497
      %v499 = vpop.f32.mrf.mxu0
      %v500 = vadd.f32 %v408, %v499
      %501 = vmatmul.bf16.gmra.mxu0 %v430
      %v502 = vpop.f32.mrf.mxu0
      %v503 = vadd.f32 %v408, %v502
      %v504 = vpop.f32.mrf.mxu0
      %v505 = vadd.f32 %v408, %v504
      %506 = vmatmul.bf16.gmra.mxu0 %v433
      %v507 = vpop.f32.mrf.mxu0
      %v508 = vadd.f32 %v408, %v507
      %v509 = vpop.f32.mrf.mxu0
      %v510 = vadd.f32 %v408, %v509
      %511 = vmatmul.bf16.gmra.mxu0 %v436
      %v512 = vpop.f32.mrf.mxu0
      %v513 = vadd.f32 %v408, %v512
      %v514 = vpop.f32.mrf.mxu0
      %v515 = vadd.f32 %v408, %v514
      %516 = vmatmul.bf16.gmra.mxu0 %v439
      %v517 = vpop.f32.mrf.mxu0
      %v518 = vadd.f32 %v408, %v517
      %v519 = vpop.f32.mrf.mxu0
      %v520 = vadd.f32 %v408, %v519
      %521 = vmatmul.bf16.gmra.mxu0 %v442
      %v522 = vpop.f32.mrf.mxu0
      %v523 = vadd.f32 %v408, %v522
      %v524 = vpop.f32.mrf.mxu0
      %v525 = vadd.f32 %v408, %v524
      %526 = vmatmul.bf16.gmra.mxu0 %v445
      %v527 = vpop.f32.mrf.mxu0
      %v528 = vadd.f32 %v408, %v527
      %v529 = vpop.f32.mrf.mxu0
      %v530 = vadd.f32 %v408, %v529
      %531 = vmatmul.bf16.gmra.mxu0 %v448
      %v532 = vpop.f32.mrf.mxu0
      %v533 = vadd.f32 %v408, %v532
      %v534 = vpop.f32.mrf.mxu0
      %v535 = vadd.f32 %v408, %v534
      %536 = vmatmul.bf16.gmra.mxu0 %v451
      %v537 = vpop.f32.mrf.mxu0
      %v538 = vadd.f32 %v408, %v537
      %v539 = vpop.f32.mrf.mxu0
      %v540 = vadd.f32 %v408, %v539
      %541 = vmatmul.bf16.gmra.mxu0 %v454
      %v542 = vpop.f32.mrf.mxu0
      %v543 = vadd.f32 %v408, %v542
      %v544 = vpop.f32.mrf.mxu0
      %v545 = vadd.f32 %v408, %v544
      %546 = vmatmul.bf16.gmra.mxu0 %v457
      %v547 = vpop.f32.mrf.mxu0
      %v548 = vadd.f32 %v408, %v547
      %v549 = vpop.f32.mrf.mxu0
      %v550 = vadd.f32 %v408, %v549
      %551 = vdwg.mxu0
      %v552 = vmax.f32 %v473, 0.0
      %v553 = vmax.f32 %v475, 0.0
      %v554 = vmax.f32 %v478, 0.0
      %v555 = vmax.f32 %v480, 0.0
      %v556 = vmax.f32 %v483, 0.0
      %v557 = vmax.f32 %v485, 0.0
      %v558 = vmax.f32 %v488, 0.0
      %v559 = vmax.f32 %v490, 0.0
      %v560 = vmax.f32 %v493, 0.0
      %v561 = vmax.f32 %v495, 0.0
      %v562 = vmax.f32 %v498, 0.0
      %v563 = vmax.f32 %v500, 0.0
      %v564 = vmax.f32 %v503, 0.0
      %v565 = vmax.f32 %v505, 0.0
      %v566 = vmax.f32 %v508, 0.0
      %v567 = vmax.f32 %v510, 0.0
      %v568 = vmax.f32 %v513, 0.0
      %v569 = vmax.f32 %v515, 0.0
      %v570 = vmax.f32 %v518, 0.0
      %v571 = vmax.f32 %v520, 0.0
      %v572 = vmax.f32 %v523, 0.0
      %v573 = vmax.f32 %v525, 0.0
      %v574 = vmax.f32 %v528, 0.0
      %v575 = vmax.f32 %v530, 0.0
      %v576 = vmax.f32 %v533, 0.0
      %v577 = vmax.f32 %v535, 0.0
      %v578 = vmax.f32 %v538, 0.0
      %v579 = vmax.f32 %v540, 0.0
      %v580 = vmax.f32 %v543, 0.0
      %v581 = vmax.f32 %v545, 0.0
      %v582 = vmax.f32 %v548, 0.0
      %v583 = vmax.f32 %v550, 0.0
      %584 = vst.msk [vmem:[#allocation2] sm:$0xff] %vm410, 0.0
      %585 = vst.msk [vmem:[#allocation2 + $0x8] sm:$0xff] %vm410, 0.0
      %vm586 = vcmask 58368
      %587 = vst.msk [vmem:[#allocation2 + $0x10] sm:$0x3] %vm586, 0.0
      %588 = vst.msk [vmem:[#allocation2 + $0x18] sm:$0xff] %vm410, 0.0
      %589 = vst.msk [vmem:[#allocation2 + $0x20] sm:$0xff] %vm410, 0.0
      %590 = vst.msk [vmem:[#allocation2 + $0x28] sm:$0x3] %vm586, 0.0
      %591 = vst.msk [vmem:[#allocation2 + $0x30] sm:$0xff] %vm410, 0.0
      %592 = vst.msk [vmem:[#allocation2 + $0x38] sm:$0xff] %vm410, 0.0
      %593 = vst.msk [vmem:[#allocation2 + $0x40] sm:$0x3] %vm586, 0.0
      %594 = vst.msk [vmem:[#allocation2 + $0x48] sm:$0xff] %vm410, 0.0
      %595 = vst.msk [vmem:[#allocation2 + $0x50] sm:$0xff] %vm410, 0.0
      %596 = vst.msk [vmem:[#allocation2 + $0x58] sm:$0x3] %vm586, 0.0
      %597 = vst.msk [vmem:[#allocation2 + $0x60] sm:$0xff] %vm410, 0.0
      %598 = vst.msk [vmem:[#allocation2 + $0x68] sm:$0xff] %vm410, 0.0
      %599 = vst.msk [vmem:[#allocation2 + $0x70] sm:$0x3] %vm586, 0.0
      %600 = vst.msk [vmem:[#allocation2 + $0x78] sm:$0xff] %vm410, 0.0
      %601 = vst.msk [vmem:[#allocation2 + $0x80] sm:$0xff] %vm410, 0.0
      %602 = vst.msk [vmem:[#allocation2 + $0x88] sm:$0x3] %vm586, 0.0
      %603 = vst.msk [vmem:[#allocation2 + $0x90] sm:$0xff] %vm410, 0.0
      %604 = vst.msk [vmem:[#allocation2 + $0x98] sm:$0xff] %vm410, 0.0
      %605 = vst.msk [vmem:[#allocation2 + $0xa0] sm:$0x3] %vm586, 0.0
      %606 = vst.msk [vmem:[#allocation2 + $0xa8] sm:$0xff] %vm410, 0.0
      %607 = vst.msk [vmem:[#allocation2 + $0xb0] sm:$0xff] %vm410, 0.0
      %608 = vst.msk [vmem:[#allocation2 + $0xb8] sm:$0x3] %vm586, 0.0
      %609 = vst.msk [vmem:[#allocation2 + $0xc0] sm:$0xff] %vm410, 0.0
      %610 = vst.msk [vmem:[#allocation2 + $0xc8] sm:$0xff] %vm410, 0.0
      %611 = vst.msk [vmem:[#allocation2 + $0xd0] sm:$0x3] %vm586, 0.0
      %612 = vst.msk [vmem:[#allocation2 + $0xd8] sm:$0xff] %vm410, 0.0
      %613 = vst.msk [vmem:[#allocation2 + $0xe0] sm:$0xff] %vm410, 0.0
      %614 = vst.msk [vmem:[#allocation2 + $0xe8] sm:$0x3] %vm586, 0.0
      %615 = vst.msk [vmem:[#allocation2 + $0xf0] sm:$0xff] %vm410, 0.0
      %616 = vst.msk [vmem:[#allocation2 + $0xf8] sm:$0xff] %vm410, 0.0
      %617 = vst.msk [vmem:[#allocation2 + $0x100] sm:$0x3] %vm586, 0.0
      %618 = vst.msk [vmem:[#allocation2 + $0x108] sm:$0xff] %vm410, 0.0
      %619 = vst.msk [vmem:[#allocation2 + $0x110] sm:$0xff] %vm410, 0.0
      %620 = vst.msk [vmem:[#allocation2 + $0x118] sm:$0x3] %vm586, 0.0
      %621 = vst.msk [vmem:[#allocation2 + $0x120] sm:$0xff] %vm410, 0.0
      %622 = vst.msk [vmem:[#allocation2 + $0x128] sm:$0xff] %vm410, 0.0
      %623 = vst.msk [vmem:[#allocation2 + $0x130] sm:$0x3] %vm586, 0.0
      %624 = vst.msk [vmem:[#allocation2 + $0x138] sm:$0xff] %vm410, 0.0
      %625 = vst.msk [vmem:[#allocation2 + $0x140] sm:$0xff] %vm410, 0.0
      %626 = vst.msk [vmem:[#allocation2 + $0x148] sm:$0x3] %vm586, 0.0
      %627 = vst.msk [vmem:[#allocation2 + $0x150] sm:$0xff] %vm410, 0.0
      %628 = vst.msk [vmem:[#allocation2 + $0x158] sm:$0xff] %vm410, 0.0
      %629 = vst.msk [vmem:[#allocation2 + $0x160] sm:$0x3] %vm586, 0.0
      %630 = vst.msk [vmem:[#allocation2 + $0x168] sm:$0xff] %vm410, 0.0
      %631 = vst.msk [vmem:[#allocation2 + $0x170] sm:$0xff] %vm410, 0.0
      %632 = vst.msk [vmem:[#allocation2 + $0x178] sm:$0x3] %vm586, 0.0
      %633 = vst.msk [vmem:[#allocation2 + $0x180] sm:$0xff] %vm410, 0.0
      %634 = vst.msk [vmem:[#allocation2 + $0x188] sm:$0xff] %vm410, 0.0
      %635 = vst.msk [vmem:[#allocation2 + $0x190] sm:$0x3] %vm586, 0.0
      %636 = vst.msk [vmem:[#allocation2 + $0x198] sm:$0xff] %vm410, 0.0
      %637 = vst.msk [vmem:[#allocation2 + $0x1a0] sm:$0xff] %vm410, 0.0
      %638 = vst.msk [vmem:[#allocation2 + $0x1a8] sm:$0x3] %vm586, 0.0
      %s639 = scalar_lea.vmem [#allocation2], 24
      %640 = vst.msk [vmem:[%s639 + $0x1] sm:$0xff] %vm410, %v552
      %641 = vst.msk [vmem:[%s639 + $0x9] sm:$0xff] %vm410, %v553
      %642 = vst.msk [vmem:[%s639 + $0x19] sm:$0xff] %vm410, %v554
      %643 = vst.msk [vmem:[%s639 + $0x21] sm:$0xff] %vm410, %v555
      %644 = vst.msk [vmem:[%s639 + $0x31] sm:$0xff] %vm410, %v556
      %645 = vst.msk [vmem:[%s639 + $0x39] sm:$0xff] %vm410, %v557
      %646 = vst.msk [vmem:[%s639 + $0x49] sm:$0xff] %vm410, %v558
      %647 = vst.msk [vmem:[%s639 + $0x51] sm:$0xff] %vm410, %v559
      %648 = vst.msk [vmem:[%s639 + $0x61] sm:$0xff] %vm410, %v560
      %649 = vst.msk [vmem:[%s639 + $0x69] sm:$0xff] %vm410, %v561
      %650 = vst.msk [vmem:[%s639 + $0x79] sm:$0xff] %vm410, %v562
      %651 = vst.msk [vmem:[%s639 + $0x81] sm:$0xff] %vm410, %v563
      %652 = vst.msk [vmem:[%s639 + $0x91] sm:$0xff] %vm410, %v564
      %653 = vst.msk [vmem:[%s639 + $0x99] sm:$0xff] %vm410, %v565
      %654 = vst.msk [vmem:[%s639 + $0xa9] sm:$0xff] %vm410, %v566
      %655 = vst.msk [vmem:[%s639 + $0xb1] sm:$0xff] %vm410, %v567
      %656 = vst.msk [vmem:[%s639 + $0xc1] sm:$0xff] %vm410, %v568
      %657 = vst.msk [vmem:[%s639 + $0xc9] sm:$0xff] %vm410, %v569
      %658 = vst.msk [vmem:[%s639 + $0xd9] sm:$0xff] %vm410, %v570
      %659 = vst.msk [vmem:[%s639 + $0xe1] sm:$0xff] %vm410, %v571
      %660 = vst.msk [vmem:[%s639 + $0xf1] sm:$0xff] %vm410, %v572
      %661 = vst.msk [vmem:[%s639 + $0xf9] sm:$0xff] %vm410, %v573
      %662 = vst.msk [vmem:[%s639 + $0x109] sm:$0xff] %vm410, %v574
      %663 = vst.msk [vmem:[%s639 + $0x111] sm:$0xff] %vm410, %v575
      %664 = vst.msk [vmem:[%s639 + $0x121] sm:$0xff] %vm410, %v576
      %665 = vst.msk [vmem:[%s639 + $0x129] sm:$0xff] %vm410, %v577
      %666 = vst.msk [vmem:[%s639 + $0x139] sm:$0xff] %vm410, %v578
      %667 = vst.msk [vmem:[%s639 + $0x141] sm:$0xff] %vm410, %v579
      %668 = vst.msk [vmem:[%s639 + $0x151] sm:$0xff] %vm410, %v580
      %669 = vst.msk [vmem:[%s639 + $0x159] sm:$0xff] %vm410, %v581
      %670 = vst.msk [vmem:[%s639 + $0x169] sm:$0xff] %vm410, %v582
      %671 = vst.msk [vmem:[%s639 + $0x171] sm:$0xff] %vm410, %v583
      %v672 = vld [vmem:[#allocation2] sm:$0xff]
      %v673 = vld [vmem:[#allocation2 + $0x8] sm:$0xff]
      %v674 = vld [vmem:[#allocation2 + $0x18] sm:$0xff]
      %v675 = vld [vmem:[#allocation2 + $0x20] sm:$0xff]
      %v676 = vld [vmem:[#allocation2 + $0x30] sm:$0xff]
      %v677 = vld [vmem:[#allocation2 + $0x38] sm:$0xff]
      %v678 = vld [vmem:[#allocation2 + $0x48] sm:$0xff]
      %v679 = vld [vmem:[#allocation2 + $0x50] sm:$0xff]
      %v680 = vld [vmem:[#allocation2 + $0x60] sm:$0xff]
      %v681 = vld [vmem:[#allocation2 + $0x68] sm:$0xff]
      %v682 = vld [vmem:[#allocation2 + $0x78] sm:$0xff]
      %v683 = vld [vmem:[#allocation2 + $0x80] sm:$0xff]
      %v684 = vld [vmem:[#allocation2 + $0x90] sm:$0xff]
      %v685 = vld [vmem:[#allocation2 + $0x98] sm:$0xff]
      %v686 = vld [vmem:[#allocation2 + $0xa8] sm:$0xff]
      %v687 = vld [vmem:[#allocation2 + $0xb0] sm:$0xff]
      %v688 = vld [vmem:[#allocation2 + $0xc0] sm:$0xff]
      %v689 = vld [vmem:[#allocation2 + $0xc8] sm:$0xff]
      %v690 = vld [vmem:[#allocation2 + $0xd8] sm:$0xff]
      %v691 = vld [vmem:[#allocation2 + $0xe0] sm:$0xff]
      %v692 = vld [vmem:[#allocation2 + $0xf0] sm:$0xff]
      %v693 = vld [vmem:[#allocation2 + $0xf8] sm:$0xff]
      %v694 = vld [vmem:[#allocation2 + $0x108] sm:$0xff]
      %v695 = vld [vmem:[#allocation2 + $0x110] sm:$0xff]
      %v696 = vld [vmem:[#allocation2 + $0x120] sm:$0xff]
      %v697 = vld [vmem:[#allocation2 + $0x128] sm:$0xff]
      %v698 = vld [vmem:[#allocation2 + $0x138] sm:$0xff]
      %v699 = vld [vmem:[#allocation2 + $0x140] sm:$0xff]
      %v700 = vld [vmem:[#allocation2 + $0x150] sm:$0xff]
      %v701 = vld [vmem:[#allocation2 + $0x158] sm:$0xff]
      %v702 = vld [vmem:[#allocation2 + $0x168] sm:$0xff]
      %v703 = vld [vmem:[#allocation2 + $0x170] sm:$0xff]
      %v704 = vpack.c.bf16 %v673, %v672
      %v705 = vpack.c.bf16 %v675, %v674
      %v706 = vpack.c.bf16 %v677, %v676
      %v707 = vpack.c.bf16 %v679, %v678
      %v708 = vpack.c.bf16 %v681, %v680
      %v709 = vpack.c.bf16 %v683, %v682
      %v710 = vpack.c.bf16 %v685, %v684
      %v711 = vpack.c.bf16 %v687, %v686
      %v712 = vpack.c.bf16 %v689, %v688
      %v713 = vpack.c.bf16 %v691, %v690
      %v714 = vpack.c.bf16 %v693, %v692
      %v715 = vpack.c.bf16 %v695, %v694
      %v716 = vpack.c.bf16 %v697, %v696
      %v717 = vpack.c.bf16 %v699, %v698
      %v718 = vpack.c.bf16 %v701, %v700
      %v719 = vpack.c.bf16 %v703, %v702
      %v720 = vld [vmem:[%s5] sm:$0xf]
      %v721 = vld [vmem:[#allocation2 + $0x1] sm:$0xff]
      %v722 = vld [vmem:[#allocation2 + $0x9] sm:$0xff]
      %v723 = vld [vmem:[#allocation2 + $0x19] sm:$0xff]
      %v724 = vld [vmem:[#allocation2 + $0x21] sm:$0xff]
      %v725 = vld [vmem:[#allocation2 + $0x31] sm:$0xff]
      %v726 = vld [vmem:[#allocation2 + $0x39] sm:$0xff]
      %v727 = vld [vmem:[#allocation2 + $0x49] sm:$0xff]
      %v728 = vld [vmem:[#allocation2 + $0x51] sm:$0xff]
      %v729 = vld [vmem:[#allocation2 + $0x61] sm:$0xff]
      %v730 = vld [vmem:[#allocation2 + $0x69] sm:$0xff]
      %v731 = vld [vmem:[#allocation2 + $0x79] sm:$0xff]
      %v732 = vld [vmem:[#allocation2 + $0x81] sm:$0xff]
      %v733 = vld [vmem:[#allocation2 + $0x91] sm:$0xff]
      %v734 = vld [vmem:[#allocation2 + $0x99] sm:$0xff]
      %v735 = vld [vmem:[#allocation2 + $0xa9] sm:$0xff]
      %v736 = vld [vmem:[#allocation2 + $0xb1] sm:$0xff]
      %v737 = vld [vmem:[#allocation2 + $0xc1] sm:$0xff]
      %v738 = vld [vmem:[#allocation2 + $0xc9] sm:$0xff]
      %v739 = vld [vmem:[#allocation2 + $0xd9] sm:$0xff]
      %v740 = vld [vmem:[#allocation2 + $0xe1] sm:$0xff]
      %v741 = vld [vmem:[#allocation2 + $0xf1] sm:$0xff]
      %v742 = vld [vmem:[#allocation2 + $0xf9] sm:$0xff]
      %v743 = vld [vmem:[#allocation2 + $0x109] sm:$0xff]
      %v744 = vld [vmem:[#allocation2 + $0x111] sm:$0xff]
      %v745 = vld [vmem:[#allocation2 + $0x121] sm:$0xff]
      %v746 = vld [vmem:[#allocation2 + $0x129] sm:$0xff]
      %v747 = vld [vmem:[#allocation2 + $0x139] sm:$0xff]
      %v748 = vld [vmem:[#allocation2 + $0x141] sm:$0xff]
      %v749 = vld [vmem:[#allocation2 + $0x151] sm:$0xff]
      %v750 = vld [vmem:[#allocation2 + $0x159] sm:$0xff]
      %v751 = vld [vmem:[#allocation2 + $0x169] sm:$0xff]
      %v752 = vld [vmem:[#allocation2 + $0x171] sm:$0xff]
      %v753 = vpack.c.bf16 %v722, %v721
      %v754 = vpack.c.bf16 %v724, %v723
      %v755 = vpack.c.bf16 %v726, %v725
      %v756 = vpack.c.bf16 %v728, %v727
      %v757 = vpack.c.bf16 %v730, %v729
      %v758 = vpack.c.bf16 %v732, %v731
      %v759 = vpack.c.bf16 %v734, %v733
      %v760 = vpack.c.bf16 %v736, %v735
      %v761 = vpack.c.bf16 %v738, %v737
      %v762 = vpack.c.bf16 %v740, %v739
      %v763 = vpack.c.bf16 %v742, %v741
      %v764 = vpack.c.bf16 %v744, %v743
      %v765 = vpack.c.bf16 %v746, %v745
      %v766 = vpack.c.bf16 %v748, %v747
      %v767 = vpack.c.bf16 %v750, %v749
      %v768 = vpack.c.bf16 %v752, %v751
      %s769 = scalar_lea.vmem %s5, 4
      %v770 = vld [vmem:[%s769] sm:$0xf]
      %v772 = vsel %vm410, %v753, 0
      %v775 = vsel %vm410, %v754, 0
      %v778 = vsel %vm410, %v755, 0
      %v781 = vsel %vm410, %v756, 0
      %v784 = vsel %vm410, %v757, 0
      %v787 = vsel %vm410, %v758, 0
      %v790 = vsel %vm410, %v759, 0
      %v793 = vsel %vm410, %v760, 0
      %v796 = vsel %vm410, %v761, 0
      %v799 = vsel %vm410, %v762, 0
      %v802 = vsel %vm410, %v763, 0
      %v805 = vsel %vm410, %v764, 0
      %v808 = vsel %vm410, %v765, 0
      %v811 = vsel %vm410, %v766, 0
      %v814 = vsel %vm410, %v767, 0
      %v817 = vsel %vm410, %v768, 0
      %v820 = vsel %vm459, %v770, 0
      %822 = vmatpush.bf16.msra.mxu0 0
      %823 = vmatpush.bf16.msra.mxu0 0
      %824 = vmatpush.bf16.msra.mxu0 0
      %825 = vmatpush.bf16.msra.mxu0 0
      %826 = vmatpush.bf16.msra.mxu0 0
      %827 = vmatpush.bf16.msra.mxu0 0
      %828 = vmatpush.bf16.msra.mxu0 0
      %829 = vmatpush.bf16.msra.mxu0 %v820
      %830 = vmatmul.bf16.gmra.mxu0 %v772
      %v831 = vpop.f32.mrf.mxu0
      %v832 = vadd.f32 0.0, %v831
      %v833 = vpop.f32.mrf.mxu0
      %v834 = vadd.f32 0.0, %v833
      %835 = vmatmul.bf16.gmra.mxu0 %v775
      %v836 = vpop.f32.mrf.mxu0
      %v837 = vadd.f32 0.0, %v836
      %v838 = vpop.f32.mrf.mxu0
      %v839 = vadd.f32 0.0, %v838
      %840 = vmatmul.bf16.gmra.mxu0 %v778
      %v841 = vpop.f32.mrf.mxu0
      %v842 = vadd.f32 0.0, %v841
      %v843 = vpop.f32.mrf.mxu0
      %v844 = vadd.f32 0.0, %v843
      %845 = vmatmul.bf16.gmra.mxu0 %v781
      %v846 = vpop.f32.mrf.mxu0
      %v847 = vadd.f32 0.0, %v846
      %v848 = vpop.f32.mrf.mxu0
      %v849 = vadd.f32 0.0, %v848
      %850 = vmatmul.bf16.gmra.mxu0 %v784
      %v851 = vpop.f32.mrf.mxu0
      %v852 = vadd.f32 0.0, %v851
      %v853 = vpop.f32.mrf.mxu0
      %v854 = vadd.f32 0.0, %v853
      %855 = vmatmul.bf16.gmra.mxu0 %v787
      %v856 = vpop.f32.mrf.mxu0
      %v857 = vadd.f32 0.0, %v856
      %v858 = vpop.f32.mrf.mxu0
      %v859 = vadd.f32 0.0, %v858
      %860 = vmatmul.bf16.gmra.mxu0 %v790
      %v861 = vpop.f32.mrf.mxu0
      %v862 = vadd.f32 0.0, %v861
      %v863 = vpop.f32.mrf.mxu0
      %v864 = vadd.f32 0.0, %v863
      %865 = vmatmul.bf16.gmra.mxu0 %v793
      %v866 = vpop.f32.mrf.mxu0
      %v867 = vadd.f32 0.0, %v866
      %v868 = vpop.f32.mrf.mxu0
      %v869 = vadd.f32 0.0, %v868
      %870 = vmatmul.bf16.gmra.mxu0 %v796
      %v871 = vpop.f32.mrf.mxu0
      %v872 = vadd.f32 0.0, %v871
      %v873 = vpop.f32.mrf.mxu0
      %v874 = vadd.f32 0.0, %v873
      %875 = vmatmul.bf16.gmra.mxu0 %v799
      %v876 = vpop.f32.mrf.mxu0
      %v877 = vadd.f32 0.0, %v876
      %v878 = vpop.f32.mrf.mxu0
      %v879 = vadd.f32 0.0, %v878
      %880 = vmatmul.bf16.gmra.mxu0 %v802
      %v881 = vpop.f32.mrf.mxu0
      %v882 = vadd.f32 0.0, %v881
      %v883 = vpop.f32.mrf.mxu0
      %v884 = vadd.f32 0.0, %v883
      %885 = vmatmul.bf16.gmra.mxu0 %v805
      %v886 = vpop.f32.mrf.mxu0
      %v887 = vadd.f32 0.0, %v886
      %v888 = vpop.f32.mrf.mxu0
      %v889 = vadd.f32 0.0, %v888
      %890 = vmatmul.bf16.gmra.mxu0 %v808
      %v891 = vpop.f32.mrf.mxu0
      %v892 = vadd.f32 0.0, %v891
      %v893 = vpop.f32.mrf.mxu0
      %v894 = vadd.f32 0.0, %v893
      %895 = vmatmul.bf16.gmra.mxu0 %v811
      %v896 = vpop.f32.mrf.mxu0
      %v897 = vadd.f32 0.0, %v896
      %v898 = vpop.f32.mrf.mxu0
      %v899 = vadd.f32 0.0, %v898
      %900 = vmatmul.bf16.gmra.mxu0 %v814
      %v901 = vpop.f32.mrf.mxu0
      %v902 = vadd.f32 0.0, %v901
      %v903 = vpop.f32.mrf.mxu0
      %v904 = vadd.f32 0.0, %v903
      %905 = vmatmul.bf16.gmra.mxu0 %v817
      %v906 = vpop.f32.mrf.mxu0
      %v907 = vadd.f32 0.0, %v906
      %v908 = vpop.f32.mrf.mxu0
      %v909 = vadd.f32 0.0, %v908
      %910 = vdwg.mxu0
      %v912 = vsel %vm410, %v704, 0
      %v915 = vsel %vm410, %v705, 0
      %v918 = vsel %vm410, %v706, 0
      %v921 = vsel %vm410, %v707, 0
      %v924 = vsel %vm410, %v708, 0
      %v927 = vsel %vm410, %v709, 0
      %v930 = vsel %vm410, %v710, 0
      %v933 = vsel %vm410, %v711, 0
      %v936 = vsel %vm410, %v712, 0
      %v939 = vsel %vm410, %v713, 0
      %v942 = vsel %vm410, %v714, 0
      %v945 = vsel %vm410, %v715, 0
      %v948 = vsel %vm410, %v716, 0
      %v951 = vsel %vm410, %v717, 0
      %v954 = vsel %vm410, %v718, 0
      %v957 = vsel %vm410, %v719, 0
      %v960 = vsel %vm459, %v720, 0
      %962 = vmatpush.bf16.msra.mxu0 0
      %963 = vmatpush.bf16.msra.mxu0 0
      %964 = vmatpush.bf16.msra.mxu0 0
      %965 = vmatpush.bf16.msra.mxu0 0
      %966 = vmatpush.bf16.msra.mxu0 0
      %967 = vmatpush.bf16.msra.mxu0 0
      %968 = vmatpush.bf16.msra.mxu0 0
      %969 = vmatpush.bf16.msra.mxu0 %v960
      %970 = vmatmul.bf16.gmra.mxu0 %v912
      %v971 = vpop.f32.mrf.mxu0
      %v972 = vadd.f32 %v832, %v971
      %v973 = vpop.f32.mrf.mxu0
      %v974 = vadd.f32 %v834, %v973
      %975 = vmatmul.bf16.gmra.mxu0 %v915
      %v976 = vpop.f32.mrf.mxu0
      %v977 = vadd.f32 %v837, %v976
      %v978 = vpop.f32.mrf.mxu0
      %v979 = vadd.f32 %v839, %v978
      %980 = vmatmul.bf16.gmra.mxu0 %v918
      %v981 = vpop.f32.mrf.mxu0
      %v982 = vadd.f32 %v842, %v981
      %v983 = vpop.f32.mrf.mxu0
      %v984 = vadd.f32 %v844, %v983
      %985 = vmatmul.bf16.gmra.mxu0 %v921
      %v986 = vpop.f32.mrf.mxu0
      %v987 = vadd.f32 %v847, %v986
      %v988 = vpop.f32.mrf.mxu0
      %v989 = vadd.f32 %v849, %v988
      %990 = vmatmul.bf16.gmra.mxu0 %v924
      %v991 = vpop.f32.mrf.mxu0
      %v992 = vadd.f32 %v852, %v991
      %v993 = vpop.f32.mrf.mxu0
      %v994 = vadd.f32 %v854, %v993
      %995 = vmatmul.bf16.gmra.mxu0 %v927
      %v996 = vpop.f32.mrf.mxu0
      %v997 = vadd.f32 %v857, %v996
      %v998 = vpop.f32.mrf.mxu0
      %v999 = vadd.f32 %v859, %v998
      %1000 = vmatmul.bf16.gmra.mxu0 %v930
      %v1001 = vpop.f32.mrf.mxu0
      %v1002 = vadd.f32 %v862, %v1001
      %v1003 = vpop.f32.mrf.mxu0
      %v1004 = vadd.f32 %v864, %v1003
      %1005 = vmatmul.bf16.gmra.mxu0 %v933
      %v1006 = vpop.f32.mrf.mxu0
      %v1007 = vadd.f32 %v867, %v1006
      %v1008 = vpop.f32.mrf.mxu0
      %v1009 = vadd.f32 %v869, %v1008
      %1010 = vmatmul.bf16.gmra.mxu0 %v936
      %v1011 = vpop.f32.mrf.mxu0
      %v1012 = vadd.f32 %v872, %v1011
      %v1013 = vpop.f32.mrf.mxu0
      %v1014 = vadd.f32 %v874, %v1013
      %1015 = vmatmul.bf16.gmra.mxu0 %v939
      %v1016 = vpop.f32.mrf.mxu0
      %v1017 = vadd.f32 %v877, %v1016
      %v1018 = vpop.f32.mrf.mxu0
      %v1019 = vadd.f32 %v879, %v1018
      %1020 = vmatmul.bf16.gmra.mxu0 %v942
      %v1021 = vpop.f32.mrf.mxu0
      %v1022 = vadd.f32 %v882, %v1021
      %v1023 = vpop.f32.mrf.mxu0
      %v1024 = vadd.f32 %v884, %v1023
      %1025 = vmatmul.bf16.gmra.mxu0 %v945
      %v1026 = vpop.f32.mrf.mxu0
      %v1027 = vadd.f32 %v887, %v1026
      %v1028 = vpop.f32.mrf.mxu0
      %v1029 = vadd.f32 %v889, %v1028
      %1030 = vmatmul.bf16.gmra.mxu0 %v948
      %v1031 = vpop.f32.mrf.mxu0
      %v1032 = vadd.f32 %v892, %v1031
      %v1033 = vpop.f32.mrf.mxu0
      %v1034 = vadd.f32 %v894, %v1033
      %1035 = vmatmul.bf16.gmra.mxu0 %v951
      %v1036 = vpop.f32.mrf.mxu0
      %v1037 = vadd.f32 %v897, %v1036
      %v1038 = vpop.f32.mrf.mxu0
      %v1039 = vadd.f32 %v899, %v1038
      %1040 = vmatmul.bf16.gmra.mxu0 %v954
      %v1041 = vpop.f32.mrf.mxu0
      %v1042 = vadd.f32 %v902, %v1041
      %v1043 = vpop.f32.mrf.mxu0
      %v1044 = vadd.f32 %v904, %v1043
      %1045 = vmatmul.bf16.gmra.mxu0 %v957
      %v1046 = vpop.f32.mrf.mxu0
      %v1047 = vadd.f32 %v907, %v1046
      %v1048 = vpop.f32.mrf.mxu0
      %v1049 = vadd.f32 %v909, %v1048
      %1050 = vdwg.mxu0
      %v1051 = vld [vmem:[#allocation2 + $0x2] sm:$0xff]
      %v1052 = vld [vmem:[#allocation2 + $0xa] sm:$0xff]
      %v1053 = vld [vmem:[#allocation2 + $0x1a] sm:$0xff]
      %v1054 = vld [vmem:[#allocation2 + $0x22] sm:$0xff]
      %v1055 = vld [vmem:[#allocation2 + $0x32] sm:$0xff]
      %v1056 = vld [vmem:[#allocation2 + $0x3a] sm:$0xff]
      %v1057 = vld [vmem:[#allocation2 + $0x4a] sm:$0xff]
      %v1058 = vld [vmem:[#allocation2 + $0x52] sm:$0xff]
      %v1059 = vld [vmem:[#allocation2 + $0x62] sm:$0xff]
      %v1060 = vld [vmem:[#allocation2 + $0x6a] sm:$0xff]
      %v1061 = vld [vmem:[#allocation2 + $0x7a] sm:$0xff]
      %v1062 = vld [vmem:[#allocation2 + $0x82] sm:$0xff]
      %v1063 = vld [vmem:[#allocation2 + $0x92] sm:$0xff]
      %v1064 = vld [vmem:[#allocation2 + $0x9a] sm:$0xff]
      %v1065 = vld [vmem:[#allocation2 + $0xaa] sm:$0xff]
      %v1066 = vld [vmem:[#allocation2 + $0xb2] sm:$0xff]
      %v1067 = vld [vmem:[#allocation2 + $0xc2] sm:$0xff]
      %v1068 = vld [vmem:[#allocation2 + $0xca] sm:$0xff]
      %v1069 = vld [vmem:[#allocation2 + $0xda] sm:$0xff]
      %v1070 = vld [vmem:[#allocation2 + $0xe2] sm:$0xff]
      %v1071 = vld [vmem:[#allocation2 + $0xf2] sm:$0xff]
      %v1072 = vld [vmem:[#allocation2 + $0xfa] sm:$0xff]
      %v1073 = vld [vmem:[#allocation2 + $0x10a] sm:$0xff]
      %v1074 = vld [vmem:[#allocation2 + $0x112] sm:$0xff]
      %v1075 = vld [vmem:[#allocation2 + $0x122] sm:$0xff]
      %v1076 = vld [vmem:[#allocation2 + $0x12a] sm:$0xff]
      %v1077 = vld [vmem:[#allocation2 + $0x13a] sm:$0xff]
      %v1078 = vld [vmem:[#allocation2 + $0x142] sm:$0xff]
      %v1079 = vld [vmem:[#allocation2 + $0x152] sm:$0xff]
      %v1080 = vld [vmem:[#allocation2 + $0x15a] sm:$0xff]
      %v1081 = vld [vmem:[#allocation2 + $0x16a] sm:$0xff]
      %v1082 = vld [vmem:[#allocation2 + $0x172] sm:$0xff]
      %v1083 = vpack.c.bf16 %v1052, %v1051
      %v1084 = vpack.c.bf16 %v1054, %v1053
      %v1085 = vpack.c.bf16 %v1056, %v1055
      %v1086 = vpack.c.bf16 %v1058, %v1057
      %v1087 = vpack.c.bf16 %v1060, %v1059
      %v1088 = vpack.c.bf16 %v1062, %v1061
      %v1089 = vpack.c.bf16 %v1064, %v1063
      %v1090 = vpack.c.bf16 %v1066, %v1065
      %v1091 = vpack.c.bf16 %v1068, %v1067
      %v1092 = vpack.c.bf16 %v1070, %v1069
      %v1093 = vpack.c.bf16 %v1072, %v1071
      %v1094 = vpack.c.bf16 %v1074, %v1073
      %v1095 = vpack.c.bf16 %v1076, %v1075
      %v1096 = vpack.c.bf16 %v1078, %v1077
      %v1097 = vpack.c.bf16 %v1080, %v1079
      %v1098 = vpack.c.bf16 %v1082, %v1081
      %s1099 = scalar_lea.vmem %s5, 8
      %v1100 = vld [vmem:[%s1099] sm:$0xf]
      %v1102 = vsel %vm410, %v1083, 0
      %v1105 = vsel %vm410, %v1084, 0
      %v1108 = vsel %vm410, %v1085, 0
      %v1111 = vsel %vm410, %v1086, 0
      %v1114 = vsel %vm410, %v1087, 0
      %v1117 = vsel %vm410, %v1088, 0
      %v1120 = vsel %vm410, %v1089, 0
      %v1123 = vsel %vm410, %v1090, 0
      %v1126 = vsel %vm410, %v1091, 0
      %v1129 = vsel %vm410, %v1092, 0
      %v1132 = vsel %vm410, %v1093, 0
      %v1135 = vsel %vm410, %v1094, 0
      %v1138 = vsel %vm410, %v1095, 0
      %v1141 = vsel %vm410, %v1096, 0
      %v1144 = vsel %vm410, %v1097, 0
      %v1147 = vsel %vm410, %v1098, 0
      %v1150 = vsel %vm459, %v1100, 0
      %1152 = vmatpush.bf16.msra.mxu0 0
      %1153 = vmatpush.bf16.msra.mxu0 0
      %1154 = vmatpush.bf16.msra.mxu0 0
      %1155 = vmatpush.bf16.msra.mxu0 0
      %1156 = vmatpush.bf16.msra.mxu0 0
      %1157 = vmatpush.bf16.msra.mxu0 0
      %1158 = vmatpush.bf16.msra.mxu0 0
      %1159 = vmatpush.bf16.msra.mxu0 %v1150
      %1160 = vmatmul.bf16.gmra.mxu0 %v1102
      %v1161 = vpop.f32.mrf.mxu0
      %v1162 = vadd.f32 0.0, %v1161
      %v1163 = vpop.f32.mrf.mxu0
      %v1164 = vadd.f32 0.0, %v1163
      %1165 = vmatmul.bf16.gmra.mxu0 %v1105
      %v1166 = vpop.f32.mrf.mxu0
      %v1167 = vadd.f32 0.0, %v1166
      %v1168 = vpop.f32.mrf.mxu0
      %v1169 = vadd.f32 0.0, %v1168
      %1170 = vmatmul.bf16.gmra.mxu0 %v1108
      %v1171 = vpop.f32.mrf.mxu0
      %v1172 = vadd.f32 0.0, %v1171
      %v1173 = vpop.f32.mrf.mxu0
      %v1174 = vadd.f32 0.0, %v1173
      %1175 = vmatmul.bf16.gmra.mxu0 %v1111
      %v1176 = vpop.f32.mrf.mxu0
      %v1177 = vadd.f32 0.0, %v1176
      %v1178 = vpop.f32.mrf.mxu0
      %v1179 = vadd.f32 0.0, %v1178
      %1180 = vmatmul.bf16.gmra.mxu0 %v1114
      %v1181 = vpop.f32.mrf.mxu0
      %v1182 = vadd.f32 0.0, %v1181
      %v1183 = vpop.f32.mrf.mxu0
      %v1184 = vadd.f32 0.0, %v1183
      %1185 = vmatmul.bf16.gmra.mxu0 %v1117
      %v1186 = vpop.f32.mrf.mxu0
      %v1187 = vadd.f32 0.0, %v1186
      %v1188 = vpop.f32.mrf.mxu0
      %v1189 = vadd.f32 0.0, %v1188
      %1190 = vmatmul.bf16.gmra.mxu0 %v1120
      %v1191 = vpop.f32.mrf.mxu0
      %v1192 = vadd.f32 0.0, %v1191
      %v1193 = vpop.f32.mrf.mxu0
      %v1194 = vadd.f32 0.0, %v1193
      %1195 = vmatmul.bf16.gmra.mxu0 %v1123
      %v1196 = vpop.f32.mrf.mxu0
      %v1197 = vadd.f32 0.0, %v1196
      %v1198 = vpop.f32.mrf.mxu0
      %v1199 = vadd.f32 0.0, %v1198
      %1200 = vmatmul.bf16.gmra.mxu0 %v1126
      %v1201 = vpop.f32.mrf.mxu0
      %v1202 = vadd.f32 0.0, %v1201
      %v1203 = vpop.f32.mrf.mxu0
      %v1204 = vadd.f32 0.0, %v1203
      %1205 = vmatmul.bf16.gmra.mxu0 %v1129
      %v1206 = vpop.f32.mrf.mxu0
      %v1207 = vadd.f32 0.0, %v1206
      %v1208 = vpop.f32.mrf.mxu0
      %v1209 = vadd.f32 0.0, %v1208
      %1210 = vmatmul.bf16.gmra.mxu0 %v1132
      %v1211 = vpop.f32.mrf.mxu0
      %v1212 = vadd.f32 0.0, %v1211
      %v1213 = vpop.f32.mrf.mxu0
      %v1214 = vadd.f32 0.0, %v1213
      %1215 = vmatmul.bf16.gmra.mxu0 %v1135
      %v1216 = vpop.f32.mrf.mxu0
      %v1217 = vadd.f32 0.0, %v1216
      %v1218 = vpop.f32.mrf.mxu0
      %v1219 = vadd.f32 0.0, %v1218
      %1220 = vmatmul.bf16.gmra.mxu0 %v1138
      %v1221 = vpop.f32.mrf.mxu0
      %v1222 = vadd.f32 0.0, %v1221
      %v1223 = vpop.f32.mrf.mxu0
      %v1224 = vadd.f32 0.0, %v1223
      %1225 = vmatmul.bf16.gmra.mxu0 %v1141
      %v1226 = vpop.f32.mrf.mxu0
      %v1227 = vadd.f32 0.0, %v1226
      %v1228 = vpop.f32.mrf.mxu0
      %v1229 = vadd.f32 0.0, %v1228
      %1230 = vmatmul.bf16.gmra.mxu0 %v1144
      %v1231 = vpop.f32.mrf.mxu0
      %v1232 = vadd.f32 0.0, %v1231
      %v1233 = vpop.f32.mrf.mxu0
      %v1234 = vadd.f32 0.0, %v1233
      %1235 = vmatmul.bf16.gmra.mxu0 %v1147
      %v1236 = vpop.f32.mrf.mxu0
      %v1237 = vadd.f32 0.0, %v1236
      %v1238 = vpop.f32.mrf.mxu0
      %v1239 = vadd.f32 0.0, %v1238
      %1240 = vdwg.mxu0
      %v1241 = vadd.f32 %v972, %v1162
      %v1242 = vadd.f32 %v974, %v1164
      %v1243 = vadd.f32 %v977, %v1167
      %v1244 = vadd.f32 %v979, %v1169
      %v1245 = vadd.f32 %v982, %v1172
      %v1246 = vadd.f32 %v984, %v1174
      %v1247 = vadd.f32 %v987, %v1177
      %v1248 = vadd.f32 %v989, %v1179
      %v1249 = vadd.f32 %v992, %v1182
      %v1250 = vadd.f32 %v994, %v1184
      %v1251 = vadd.f32 %v997, %v1187
      %v1252 = vadd.f32 %v999, %v1189
      %v1253 = vadd.f32 %v1002, %v1192
      %v1254 = vadd.f32 %v1004, %v1194
      %v1255 = vadd.f32 %v1007, %v1197
      %v1256 = vadd.f32 %v1009, %v1199
      %v1257 = vadd.f32 %v1012, %v1202
      %v1258 = vadd.f32 %v1014, %v1204
      %v1259 = vadd.f32 %v1017, %v1207
      %v1260 = vadd.f32 %v1019, %v1209
      %v1261 = vadd.f32 %v1022, %v1212
      %v1262 = vadd.f32 %v1024, %v1214
      %v1263 = vadd.f32 %v1027, %v1217
      %v1264 = vadd.f32 %v1029, %v1219
      %v1265 = vadd.f32 %v1032, %v1222
      %v1266 = vadd.f32 %v1034, %v1224
      %v1267 = vadd.f32 %v1037, %v1227
      %v1268 = vadd.f32 %v1039, %v1229
      %v1269 = vadd.f32 %v1042, %v1232
      %v1270 = vadd.f32 %v1044, %v1234
      %v1271 = vadd.f32 %v1047, %v1237
      %v1272 = vadd.f32 %v1049, %v1239
      %v1273 = vld [vmem:[%s639] sm:$0xff]
      %v1274 = vld [vmem:[%s639 + $0x8] sm:$0xff]
      %v1275 = vld [vmem:[%s639 + $0x18] sm:$0xff]
      %v1276 = vld [vmem:[%s639 + $0x20] sm:$0xff]
      %v1277 = vld [vmem:[%s639 + $0x30] sm:$0xff]
      %v1278 = vld [vmem:[%s639 + $0x38] sm:$0xff]
      %v1279 = vld [vmem:[%s639 + $0x48] sm:$0xff]
      %v1280 = vld [vmem:[%s639 + $0x50] sm:$0xff]
      %v1281 = vld [vmem:[%s639 + $0x60] sm:$0xff]
      %v1282 = vld [vmem:[%s639 + $0x68] sm:$0xff]
      %v1283 = vld [vmem:[%s639 + $0x78] sm:$0xff]
      %v1284 = vld [vmem:[%s639 + $0x80] sm:$0xff]
      %v1285 = vld [vmem:[%s639 + $0x90] sm:$0xff]
      %v1286 = vld [vmem:[%s639 + $0x98] sm:$0xff]
      %v1287 = vld [vmem:[%s639 + $0xa8] sm:$0xff]
      %v1288 = vld [vmem:[%s639 + $0xb0] sm:$0xff]
      %v1289 = vld [vmem:[%s639 + $0xc0] sm:$0xff]
      %v1290 = vld [vmem:[%s639 + $0xc8] sm:$0xff]
      %v1291 = vld [vmem:[%s639 + $0xd8] sm:$0xff]
      %v1292 = vld [vmem:[%s639 + $0xe0] sm:$0xff]
      %v1293 = vld [vmem:[%s639 + $0xf0] sm:$0xff]
      %v1294 = vld [vmem:[%s639 + $0xf8] sm:$0xff]
      %v1295 = vld [vmem:[%s639 + $0x108] sm:$0xff]
      %v1296 = vld [vmem:[%s639 + $0x110] sm:$0xff]
      %v1297 = vld [vmem:[%s639 + $0x120] sm:$0xff]
      %v1298 = vld [vmem:[%s639 + $0x128] sm:$0xff]
      %v1299 = vld [vmem:[%s639 + $0x138] sm:$0xff]
      %v1300 = vld [vmem:[%s639 + $0x140] sm:$0xff]
      %v1301 = vld [vmem:[%s639 + $0x150] sm:$0xff]
      %v1302 = vld [vmem:[%s639 + $0x158] sm:$0xff]
      %v1303 = vld [vmem:[%s639 + $0x168] sm:$0xff]
      %v1304 = vld [vmem:[%s639 + $0x170] sm:$0xff]
      %v1305 = vpack.c.bf16 %v1274, %v1273
      %v1306 = vpack.c.bf16 %v1276, %v1275
      %v1307 = vpack.c.bf16 %v1278, %v1277
      %v1308 = vpack.c.bf16 %v1280, %v1279
      %v1309 = vpack.c.bf16 %v1282, %v1281
      %v1310 = vpack.c.bf16 %v1284, %v1283
      %v1311 = vpack.c.bf16 %v1286, %v1285
      %v1312 = vpack.c.bf16 %v1288, %v1287
      %v1313 = vpack.c.bf16 %v1290, %v1289
      %v1314 = vpack.c.bf16 %v1292, %v1291
      %v1315 = vpack.c.bf16 %v1294, %v1293
      %v1316 = vpack.c.bf16 %v1296, %v1295
      %v1317 = vpack.c.bf16 %v1298, %v1297
      %v1318 = vpack.c.bf16 %v1300, %v1299
      %v1319 = vpack.c.bf16 %v1302, %v1301
      %v1320 = vpack.c.bf16 %v1304, %v1303
      %s1321 = scalar_lea.vmem %s5, 12
      %v1322 = vld [vmem:[%s1321] sm:$0xf]
      %v1324 = vsel %vm410, %v1305, 0
      %v1327 = vsel %vm410, %v1306, 0
      %v1330 = vsel %vm410, %v1307, 0
      %v1333 = vsel %vm410, %v1308, 0
      %v1336 = vsel %vm410, %v1309, 0
      %v1339 = vsel %vm410, %v1310, 0
      %v1342 = vsel %vm410, %v1311, 0
      %v1345 = vsel %vm410, %v1312, 0
      %v1348 = vsel %vm410, %v1313, 0
      %v1351 = vsel %vm410, %v1314, 0
      %v1354 = vsel %vm410, %v1315, 0
      %v1357 = vsel %vm410, %v1316, 0
      %v1360 = vsel %vm410, %v1317, 0
      %v1363 = vsel %vm410, %v1318, 0
      %v1366 = vsel %vm410, %v1319, 0
      %v1369 = vsel %vm410, %v1320, 0
      %v1372 = vsel %vm459, %v1322, 0
      %1374 = vmatpush.bf16.msra.mxu0 0
      %1375 = vmatpush.bf16.msra.mxu0 0
      %1376 = vmatpush.bf16.msra.mxu0 0
      %1377 = vmatpush.bf16.msra.mxu0 0
      %1378 = vmatpush.bf16.msra.mxu0 0
      %1379 = vmatpush.bf16.msra.mxu0 0
      %1380 = vmatpush.bf16.msra.mxu0 0
      %1381 = vmatpush.bf16.msra.mxu0 %v1372
      %1382 = vmatmul.bf16.gmra.mxu0 %v1324
      %v1383 = vpop.f32.mrf.mxu0
      %v1384 = vadd.f32 0.0, %v1383
      %v1385 = vpop.f32.mrf.mxu0
      %v1386 = vadd.f32 0.0, %v1385
      %1387 = vmatmul.bf16.gmra.mxu0 %v1327
      %v1388 = vpop.f32.mrf.mxu0
      %v1389 = vadd.f32 0.0, %v1388
      %v1390 = vpop.f32.mrf.mxu0
      %v1391 = vadd.f32 0.0, %v1390
      %1392 = vmatmul.bf16.gmra.mxu0 %v1330
      %v1393 = vpop.f32.mrf.mxu0
      %v1394 = vadd.f32 0.0, %v1393
      %v1395 = vpop.f32.mrf.mxu0
      %v1396 = vadd.f32 0.0, %v1395
      %1397 = vmatmul.bf16.gmra.mxu0 %v1333
      %v1398 = vpop.f32.mrf.mxu0
      %v1399 = vadd.f32 0.0, %v1398
      %v1400 = vpop.f32.mrf.mxu0
      %v1401 = vadd.f32 0.0, %v1400
      %1402 = vmatmul.bf16.gmra.mxu0 %v1336
      %v1403 = vpop.f32.mrf.mxu0
      %v1404 = vadd.f32 0.0, %v1403
      %v1405 = vpop.f32.mrf.mxu0
      %v1406 = vadd.f32 0.0, %v1405
      %1407 = vmatmul.bf16.gmra.mxu0 %v1339
      %v1408 = vpop.f32.mrf.mxu0
      %v1409 = vadd.f32 0.0, %v1408
      %v1410 = vpop.f32.mrf.mxu0
      %v1411 = vadd.f32 0.0, %v1410
      %1412 = vmatmul.bf16.gmra.mxu0 %v1342
      %v1413 = vpop.f32.mrf.mxu0
      %v1414 = vadd.f32 0.0, %v1413
      %v1415 = vpop.f32.mrf.mxu0
      %v1416 = vadd.f32 0.0, %v1415
      %1417 = vmatmul.bf16.gmra.mxu0 %v1345
      %v1418 = vpop.f32.mrf.mxu0
      %v1419 = vadd.f32 0.0, %v1418
      %v1420 = vpop.f32.mrf.mxu0
      %v1421 = vadd.f32 0.0, %v1420
      %1422 = vmatmul.bf16.gmra.mxu0 %v1348
      %v1423 = vpop.f32.mrf.mxu0
      %v1424 = vadd.f32 0.0, %v1423
      %v1425 = vpop.f32.mrf.mxu0
      %v1426 = vadd.f32 0.0, %v1425
      %1427 = vmatmul.bf16.gmra.mxu0 %v1351
      %v1428 = vpop.f32.mrf.mxu0
      %v1429 = vadd.f32 0.0, %v1428
      %v1430 = vpop.f32.mrf.mxu0
      %v1431 = vadd.f32 0.0, %v1430
      %1432 = vmatmul.bf16.gmra.mxu0 %v1354
      %v1433 = vpop.f32.mrf.mxu0
      %v1434 = vadd.f32 0.0, %v1433
      %v1435 = vpop.f32.mrf.mxu0
      %v1436 = vadd.f32 0.0, %v1435
      %1437 = vmatmul.bf16.gmra.mxu0 %v1357
      %v1438 = vpop.f32.mrf.mxu0
      %v1439 = vadd.f32 0.0, %v1438
      %v1440 = vpop.f32.mrf.mxu0
      %v1441 = vadd.f32 0.0, %v1440
      %1442 = vmatmul.bf16.gmra.mxu0 %v1360
      %v1443 = vpop.f32.mrf.mxu0
      %v1444 = vadd.f32 0.0, %v1443
      %v1445 = vpop.f32.mrf.mxu0
      %v1446 = vadd.f32 0.0, %v1445
      %1447 = vmatmul.bf16.gmra.mxu0 %v1363
      %v1448 = vpop.f32.mrf.mxu0
      %v1449 = vadd.f32 0.0, %v1448
      %v1450 = vpop.f32.mrf.mxu0
      %v1451 = vadd.f32 0.0, %v1450
      %1452 = vmatmul.bf16.gmra.mxu0 %v1366
      %v1453 = vpop.f32.mrf.mxu0
      %v1454 = vadd.f32 0.0, %v1453
      %v1455 = vpop.f32.mrf.mxu0
      %v1456 = vadd.f32 0.0, %v1455
      %1457 = vmatmul.bf16.gmra.mxu0 %v1369
      %v1458 = vpop.f32.mrf.mxu0
      %v1459 = vadd.f32 0.0, %v1458
      %v1460 = vpop.f32.mrf.mxu0
      %v1461 = vadd.f32 0.0, %v1460
      %1462 = vdwg.mxu0
      %v1463 = vadd.f32 %v1241, %v1384
      %v1464 = vadd.f32 %v1242, %v1386
      %v1465 = vadd.f32 %v1243, %v1389
      %v1466 = vadd.f32 %v1244, %v1391
      %v1467 = vadd.f32 %v1245, %v1394
      %v1468 = vadd.f32 %v1246, %v1396
      %v1469 = vadd.f32 %v1247, %v1399
      %v1470 = vadd.f32 %v1248, %v1401
      %v1471 = vadd.f32 %v1249, %v1404
      %v1472 = vadd.f32 %v1250, %v1406
      %v1473 = vadd.f32 %v1251, %v1409
      %v1474 = vadd.f32 %v1252, %v1411
      %v1475 = vadd.f32 %v1253, %v1414
      %v1476 = vadd.f32 %v1254, %v1416
      %v1477 = vadd.f32 %v1255, %v1419
      %v1478 = vadd.f32 %v1256, %v1421
      %v1479 = vadd.f32 %v1257, %v1424
      %v1480 = vadd.f32 %v1258, %v1426
      %v1481 = vadd.f32 %v1259, %v1429
      %v1482 = vadd.f32 %v1260, %v1431
      %v1483 = vadd.f32 %v1261, %v1434
      %v1484 = vadd.f32 %v1262, %v1436
      %v1485 = vadd.f32 %v1263, %v1439
      %v1486 = vadd.f32 %v1264, %v1441
      %v1487 = vadd.f32 %v1265, %v1444
      %v1488 = vadd.f32 %v1266, %v1446
      %v1489 = vadd.f32 %v1267, %v1449
      %v1490 = vadd.f32 %v1268, %v1451
      %v1491 = vadd.f32 %v1269, %v1454
      %v1492 = vadd.f32 %v1270, %v1456
      %v1493 = vadd.f32 %v1271, %v1459
      %v1494 = vadd.f32 %v1272, %v1461
      %v1495 = vld [vmem:[%s639 + $0x1] sm:$0xff]
      %v1496 = vld [vmem:[%s639 + $0x9] sm:$0xff]
      %v1497 = vld [vmem:[%s639 + $0x19] sm:$0xff]
      %v1498 = vld [vmem:[%s639 + $0x21] sm:$0xff]
      %v1499 = vld [vmem:[%s639 + $0x31] sm:$0xff]
      %v1500 = vld [vmem:[%s639 + $0x39] sm:$0xff]
      %v1501 = vld [vmem:[%s639 + $0x49] sm:$0xff]
      %v1502 = vld [vmem:[%s639 + $0x51] sm:$0xff]
      %v1503 = vld [vmem:[%s639 + $0x61] sm:$0xff]
      %v1504 = vld [vmem:[%s639 + $0x69] sm:$0xff]
      %v1505 = vld [vmem:[%s639 + $0x79] sm:$0xff]
      %v1506 = vld [vmem:[%s639 + $0x81] sm:$0xff]
      %v1507 = vld [vmem:[%s639 + $0x91] sm:$0xff]
      %v1508 = vld [vmem:[%s639 + $0x99] sm:$0xff]
      %v1509 = vld [vmem:[%s639 + $0xa9] sm:$0xff]
      %v1510 = vld [vmem:[%s639 + $0xb1] sm:$0xff]
      %v1511 = vld [vmem:[%s639 + $0xc1] sm:$0xff]
      %v1512 = vld [vmem:[%s639 + $0xc9] sm:$0xff]
      %v1513 = vld [vmem:[%s639 + $0xd9] sm:$0xff]
      %v1514 = vld [vmem:[%s639 + $0xe1] sm:$0xff]
      %v1515 = vld [vmem:[%s639 + $0xf1] sm:$0xff]
      %v1516 = vld [vmem:[%s639 + $0xf9] sm:$0xff]
      %v1517 = vld [vmem:[%s639 + $0x109] sm:$0xff]
      %v1518 = vld [vmem:[%s639 + $0x111] sm:$0xff]
      %v1519 = vld [vmem:[%s639 + $0x121] sm:$0xff]
      %v1520 = vld [vmem:[%s639 + $0x129] sm:$0xff]
      %v1521 = vld [vmem:[%s639 + $0x139] sm:$0xff]
      %v1522 = vld [vmem:[%s639 + $0x141] sm:$0xff]
      %v1523 = vld [vmem:[%s639 + $0x151] sm:$0xff]
      %v1524 = vld [vmem:[%s639 + $0x159] sm:$0xff]
      %v1525 = vld [vmem:[%s639 + $0x169] sm:$0xff]
      %v1526 = vld [vmem:[%s639 + $0x171] sm:$0xff]
      %v1527 = vpack.c.bf16 %v1496, %v1495
      %v1528 = vpack.c.bf16 %v1498, %v1497
      %v1529 = vpack.c.bf16 %v1500, %v1499
      %v1530 = vpack.c.bf16 %v1502, %v1501
      %v1531 = vpack.c.bf16 %v1504, %v1503
      %v1532 = vpack.c.bf16 %v1506, %v1505
      %v1533 = vpack.c.bf16 %v1508, %v1507
      %v1534 = vpack.c.bf16 %v1510, %v1509
      %v1535 = vpack.c.bf16 %v1512, %v1511
      %v1536 = vpack.c.bf16 %v1514, %v1513
      %v1537 = vpack.c.bf16 %v1516, %v1515
      %v1538 = vpack.c.bf16 %v1518, %v1517
      %v1539 = vpack.c.bf16 %v1520, %v1519
      %v1540 = vpack.c.bf16 %v1522, %v1521
      %v1541 = vpack.c.bf16 %v1524, %v1523
      %v1542 = vpack.c.bf16 %v1526, %v1525
      %s1543 = scalar_lea.vmem %s5, 16
      %v1544 = vld [vmem:[%s1543] sm:$0xf]
      %v1546 = vsel %vm410, %v1527, 0
      %v1549 = vsel %vm410, %v1528, 0
      %v1552 = vsel %vm410, %v1529, 0
      %v1555 = vsel %vm410, %v1530, 0
      %v1558 = vsel %vm410, %v1531, 0
      %v1561 = vsel %vm410, %v1532, 0
      %v1564 = vsel %vm410, %v1533, 0
      %v1567 = vsel %vm410, %v1534, 0
      %v1570 = vsel %vm410, %v1535, 0
      %v1573 = vsel %vm410, %v1536, 0
      %v1576 = vsel %vm410, %v1537, 0
      %v1579 = vsel %vm410, %v1538, 0
      %v1582 = vsel %vm410, %v1539, 0
      %v1585 = vsel %vm410, %v1540, 0
      %v1588 = vsel %vm410, %v1541, 0
      %v1591 = vsel %vm410, %v1542, 0
      %v1594 = vsel %vm459, %v1544, 0
      %1596 = vmatpush.bf16.msra.mxu0 0
      %1597 = vmatpush.bf16.msra.mxu0 0
      %1598 = vmatpush.bf16.msra.mxu0 0
      %1599 = vmatpush.bf16.msra.mxu0 0
      %1600 = vmatpush.bf16.msra.mxu0 0
      %1601 = vmatpush.bf16.msra.mxu0 0
      %1602 = vmatpush.bf16.msra.mxu0 0
      %1603 = vmatpush.bf16.msra.mxu0 %v1594
      %1604 = vmatmul.bf16.gmra.mxu0 %v1546
      %v1605 = vpop.f32.mrf.mxu0
      %v1606 = vadd.f32 0.0, %v1605
      %v1607 = vpop.f32.mrf.mxu0
      %v1608 = vadd.f32 0.0, %v1607
      %1609 = vmatmul.bf16.gmra.mxu0 %v1549
      %v1610 = vpop.f32.mrf.mxu0
      %v1611 = vadd.f32 0.0, %v1610
      %v1612 = vpop.f32.mrf.mxu0
      %v1613 = vadd.f32 0.0, %v1612
      %1614 = vmatmul.bf16.gmra.mxu0 %v1552
      %v1615 = vpop.f32.mrf.mxu0
      %v1616 = vadd.f32 0.0, %v1615
      %v1617 = vpop.f32.mrf.mxu0
      %v1618 = vadd.f32 0.0, %v1617
      %1619 = vmatmul.bf16.gmra.mxu0 %v1555
      %v1620 = vpop.f32.mrf.mxu0
      %v1621 = vadd.f32 0.0, %v1620
      %v1622 = vpop.f32.mrf.mxu0
      %v1623 = vadd.f32 0.0, %v1622
      %1624 = vmatmul.bf16.gmra.mxu0 %v1558
      %v1625 = vpop.f32.mrf.mxu0
      %v1626 = vadd.f32 0.0, %v1625
      %v1627 = vpop.f32.mrf.mxu0
      %v1628 = vadd.f32 0.0, %v1627
      %1629 = vmatmul.bf16.gmra.mxu0 %v1561
      %v1630 = vpop.f32.mrf.mxu0
      %v1631 = vadd.f32 0.0, %v1630
      %v1632 = vpop.f32.mrf.mxu0
      %v1633 = vadd.f32 0.0, %v1632
      %1634 = vmatmul.bf16.gmra.mxu0 %v1564
      %v1635 = vpop.f32.mrf.mxu0
      %v1636 = vadd.f32 0.0, %v1635
      %v1637 = vpop.f32.mrf.mxu0
      %v1638 = vadd.f32 0.0, %v1637
      %1639 = vmatmul.bf16.gmra.mxu0 %v1567
      %v1640 = vpop.f32.mrf.mxu0
      %v1641 = vadd.f32 0.0, %v1640
      %v1642 = vpop.f32.mrf.mxu0
      %v1643 = vadd.f32 0.0, %v1642
      %1644 = vmatmul.bf16.gmra.mxu0 %v1570
      %v1645 = vpop.f32.mrf.mxu0
      %v1646 = vadd.f32 0.0, %v1645
      %v1647 = vpop.f32.mrf.mxu0
      %v1648 = vadd.f32 0.0, %v1647
      %1649 = vmatmul.bf16.gmra.mxu0 %v1573
      %v1650 = vpop.f32.mrf.mxu0
      %v1651 = vadd.f32 0.0, %v1650
      %v1652 = vpop.f32.mrf.mxu0
      %v1653 = vadd.f32 0.0, %v1652
      %1654 = vmatmul.bf16.gmra.mxu0 %v1576
      %v1655 = vpop.f32.mrf.mxu0
      %v1656 = vadd.f32 0.0, %v1655
      %v1657 = vpop.f32.mrf.mxu0
      %v1658 = vadd.f32 0.0, %v1657
      %1659 = vmatmul.bf16.gmra.mxu0 %v1579
      %v1660 = vpop.f32.mrf.mxu0
      %v1661 = vadd.f32 0.0, %v1660
      %v1662 = vpop.f32.mrf.mxu0
      %v1663 = vadd.f32 0.0, %v1662
      %1664 = vmatmul.bf16.gmra.mxu0 %v1582
      %v1665 = vpop.f32.mrf.mxu0
      %v1666 = vadd.f32 0.0, %v1665
      %v1667 = vpop.f32.mrf.mxu0
      %v1668 = vadd.f32 0.0, %v1667
      %1669 = vmatmul.bf16.gmra.mxu0 %v1585
      %v1670 = vpop.f32.mrf.mxu0
      %v1671 = vadd.f32 0.0, %v1670
      %v1672 = vpop.f32.mrf.mxu0
      %v1673 = vadd.f32 0.0, %v1672
      %1674 = vmatmul.bf16.gmra.mxu0 %v1588
      %v1675 = vpop.f32.mrf.mxu0
      %v1676 = vadd.f32 0.0, %v1675
      %v1677 = vpop.f32.mrf.mxu0
      %v1678 = vadd.f32 0.0, %v1677
      %1679 = vmatmul.bf16.gmra.mxu0 %v1591
      %v1680 = vpop.f32.mrf.mxu0
      %v1681 = vadd.f32 0.0, %v1680
      %v1682 = vpop.f32.mrf.mxu0
      %v1683 = vadd.f32 0.0, %v1682
      %1684 = vdwg.mxu0
      %v1685 = vadd.f32 %v1463, %v1606
      %v1686 = vadd.f32 %v1464, %v1608
      %v1687 = vadd.f32 %v1465, %v1611
      %v1688 = vadd.f32 %v1466, %v1613
      %v1689 = vadd.f32 %v1467, %v1616
      %v1690 = vadd.f32 %v1468, %v1618
      %v1691 = vadd.f32 %v1469, %v1621
      %v1692 = vadd.f32 %v1470, %v1623
      %v1693 = vadd.f32 %v1471, %v1626
      %v1694 = vadd.f32 %v1472, %v1628
      %v1695 = vadd.f32 %v1473, %v1631
      %v1696 = vadd.f32 %v1474, %v1633
      %v1697 = vadd.f32 %v1475, %v1636
      %v1698 = vadd.f32 %v1476, %v1638
      %v1699 = vadd.f32 %v1477, %v1641
      %v1700 = vadd.f32 %v1478, %v1643
      %v1701 = vadd.f32 %v1479, %v1646
      %v1702 = vadd.f32 %v1480, %v1648
      %v1703 = vadd.f32 %v1481, %v1651
      %v1704 = vadd.f32 %v1482, %v1653
      %v1705 = vadd.f32 %v1483, %v1656
      %v1706 = vadd.f32 %v1484, %v1658
      %v1707 = vadd.f32 %v1485, %v1661
      %v1708 = vadd.f32 %v1486, %v1663
      %v1709 = vadd.f32 %v1487, %v1666
      %v1710 = vadd.f32 %v1488, %v1668
      %v1711 = vadd.f32 %v1489, %v1671
      %v1712 = vadd.f32 %v1490, %v1673
      %v1713 = vadd.f32 %v1491, %v1676
      %v1714 = vadd.f32 %v1492, %v1678
      %v1715 = vadd.f32 %v1493, %v1681
      %v1716 = vadd.f32 %v1494, %v1683
      %v1717 = vld [vmem:[%s639 + $0x2] sm:$0xff]
      %v1718 = vld [vmem:[%s639 + $0xa] sm:$0xff]
      %v1719 = vld [vmem:[%s639 + $0x1a] sm:$0xff]
      %v1720 = vld [vmem:[%s639 + $0x22] sm:$0xff]
      %v1721 = vld [vmem:[%s639 + $0x32] sm:$0xff]
      %v1722 = vld [vmem:[%s639 + $0x3a] sm:$0xff]
      %v1723 = vld [vmem:[%s639 + $0x4a] sm:$0xff]
      %v1724 = vld [vmem:[%s639 + $0x52] sm:$0xff]
      %v1725 = vld [vmem:[%s639 + $0x62] sm:$0xff]
      %v1726 = vld [vmem:[%s639 + $0x6a] sm:$0xff]
      %v1727 = vld [vmem:[%s639 + $0x7a] sm:$0xff]
      %v1728 = vld [vmem:[%s639 + $0x82] sm:$0xff]
      %v1729 = vld [vmem:[%s639 + $0x92] sm:$0xff]
      %v1730 = vld [vmem:[%s639 + $0x9a] sm:$0xff]
      %v1731 = vld [vmem:[%s639 + $0xaa] sm:$0xff]
      %v1732 = vld [vmem:[%s639 + $0xb2] sm:$0xff]
      %v1733 = vld [vmem:[%s639 + $0xc2] sm:$0xff]
      %v1734 = vld [vmem:[%s639 + $0xca] sm:$0xff]
      %v1735 = vld [vmem:[%s639 + $0xda] sm:$0xff]
      %v1736 = vld [vmem:[%s639 + $0xe2] sm:$0xff]
      %v1737 = vld [vmem:[%s639 + $0xf2] sm:$0xff]
      %v1738 = vld [vmem:[%s639 + $0xfa] sm:$0xff]
      %v1739 = vld [vmem:[%s639 + $0x10a] sm:$0xff]
      %v1740 = vld [vmem:[%s639 + $0x112] sm:$0xff]
      %v1741 = vld [vmem:[%s639 + $0x122] sm:$0xff]
      %v1742 = vld [vmem:[%s639 + $0x12a] sm:$0xff]
      %v1743 = vld [vmem:[%s639 + $0x13a] sm:$0xff]
      %v1744 = vld [vmem:[%s639 + $0x142] sm:$0xff]
      %v1745 = vld [vmem:[%s639 + $0x152] sm:$0xff]
      %v1746 = vld [vmem:[%s639 + $0x15a] sm:$0xff]
      %v1747 = vld [vmem:[%s639 + $0x16a] sm:$0xff]
      %v1748 = vld [vmem:[%s639 + $0x172] sm:$0xff]
      %v1749 = vpack.c.bf16 %v1718, %v1717
      %v1750 = vpack.c.bf16 %v1720, %v1719
      %v1751 = vpack.c.bf16 %v1722, %v1721
      %v1752 = vpack.c.bf16 %v1724, %v1723
      %v1753 = vpack.c.bf16 %v1726, %v1725
      %v1754 = vpack.c.bf16 %v1728, %v1727
      %v1755 = vpack.c.bf16 %v1730, %v1729
      %v1756 = vpack.c.bf16 %v1732, %v1731
      %v1757 = vpack.c.bf16 %v1734, %v1733
      %v1758 = vpack.c.bf16 %v1736, %v1735
      %v1759 = vpack.c.bf16 %v1738, %v1737
      %v1760 = vpack.c.bf16 %v1740, %v1739
      %v1761 = vpack.c.bf16 %v1742, %v1741
      %v1762 = vpack.c.bf16 %v1744, %v1743
      %v1763 = vpack.c.bf16 %v1746, %v1745
      %v1764 = vpack.c.bf16 %v1748, %v1747
      %s1765 = scalar_lea.vmem %s5, 20
      %v1766 = vld [vmem:[%s1765] sm:$0xf]
      %v1768 = vsel %vm410, %v1749, 0
      %v1771 = vsel %vm410, %v1750, 0
      %v1774 = vsel %vm410, %v1751, 0
      %v1777 = vsel %vm410, %v1752, 0
      %v1780 = vsel %vm410, %v1753, 0
      %v1783 = vsel %vm410, %v1754, 0
      %v1786 = vsel %vm410, %v1755, 0
      %v1789 = vsel %vm410, %v1756, 0
      %v1792 = vsel %vm410, %v1757, 0
      %v1795 = vsel %vm410, %v1758, 0
      %v1798 = vsel %vm410, %v1759, 0
      %v1801 = vsel %vm410, %v1760, 0
      %v1804 = vsel %vm410, %v1761, 0
      %v1807 = vsel %vm410, %v1762, 0
      %v1810 = vsel %vm410, %v1763, 0
      %v1813 = vsel %vm410, %v1764, 0
      %v1816 = vsel %vm459, %v1766, 0
      %1818 = vmatpush.bf16.msra.mxu0 0
      %1819 = vmatpush.bf16.msra.mxu0 0
      %1820 = vmatpush.bf16.msra.mxu0 0
      %1821 = vmatpush.bf16.msra.mxu0 0
      %1822 = vmatpush.bf16.msra.mxu0 0
      %1823 = vmatpush.bf16.msra.mxu0 0
      %1824 = vmatpush.bf16.msra.mxu0 0
      %1825 = vmatpush.bf16.msra.mxu0 %v1816
      %1826 = vmatmul.bf16.gmra.mxu0 %v1768
      %v1827 = vpop.f32.mrf.mxu0
      %v1828 = vadd.f32 0.0, %v1827
      %v1829 = vpop.f32.mrf.mxu0
      %v1830 = vadd.f32 0.0, %v1829
      %1831 = vmatmul.bf16.gmra.mxu0 %v1771
      %v1832 = vpop.f32.mrf.mxu0
      %v1833 = vadd.f32 0.0, %v1832
      %v1834 = vpop.f32.mrf.mxu0
      %v1835 = vadd.f32 0.0, %v1834
      %1836 = vmatmul.bf16.gmra.mxu0 %v1774
      %v1837 = vpop.f32.mrf.mxu0
      %v1838 = vadd.f32 0.0, %v1837
      %v1839 = vpop.f32.mrf.mxu0
      %v1840 = vadd.f32 0.0, %v1839
      %1841 = vmatmul.bf16.gmra.mxu0 %v1777
      %v1842 = vpop.f32.mrf.mxu0
      %v1843 = vadd.f32 0.0, %v1842
      %v1844 = vpop.f32.mrf.mxu0
      %v1845 = vadd.f32 0.0, %v1844
      %1846 = vmatmul.bf16.gmra.mxu0 %v1780
      %v1847 = vpop.f32.mrf.mxu0
      %v1848 = vadd.f32 0.0, %v1847
      %v1849 = vpop.f32.mrf.mxu0
      %v1850 = vadd.f32 0.0, %v1849
      %1851 = vmatmul.bf16.gmra.mxu0 %v1783
      %v1852 = vpop.f32.mrf.mxu0
      %v1853 = vadd.f32 0.0, %v1852
      %v1854 = vpop.f32.mrf.mxu0
      %v1855 = vadd.f32 0.0, %v1854
      %1856 = vmatmul.bf16.gmra.mxu0 %v1786
      %v1857 = vpop.f32.mrf.mxu0
      %v1858 = vadd.f32 0.0, %v1857
      %v1859 = vpop.f32.mrf.mxu0
      %v1860 = vadd.f32 0.0, %v1859
      %1861 = vmatmul.bf16.gmra.mxu0 %v1789
      %v1862 = vpop.f32.mrf.mxu0
      %v1863 = vadd.f32 0.0, %v1862
      %v1864 = vpop.f32.mrf.mxu0
      %v1865 = vadd.f32 0.0, %v1864
      %1866 = vmatmul.bf16.gmra.mxu0 %v1792
      %v1867 = vpop.f32.mrf.mxu0
      %v1868 = vadd.f32 0.0, %v1867
      %v1869 = vpop.f32.mrf.mxu0
      %v1870 = vadd.f32 0.0, %v1869
      %1871 = vmatmul.bf16.gmra.mxu0 %v1795
      %v1872 = vpop.f32.mrf.mxu0
      %v1873 = vadd.f32 0.0, %v1872
      %v1874 = vpop.f32.mrf.mxu0
      %v1875 = vadd.f32 0.0, %v1874
      %1876 = vmatmul.bf16.gmra.mxu0 %v1798
      %v1877 = vpop.f32.mrf.mxu0
      %v1878 = vadd.f32 0.0, %v1877
      %v1879 = vpop.f32.mrf.mxu0
      %v1880 = vadd.f32 0.0, %v1879
      %1881 = vmatmul.bf16.gmra.mxu0 %v1801
      %v1882 = vpop.f32.mrf.mxu0
      %v1883 = vadd.f32 0.0, %v1882
      %v1884 = vpop.f32.mrf.mxu0
      %v1885 = vadd.f32 0.0, %v1884
      %1886 = vmatmul.bf16.gmra.mxu0 %v1804
      %v1887 = vpop.f32.mrf.mxu0
      %v1888 = vadd.f32 0.0, %v1887
      %v1889 = vpop.f32.mrf.mxu0
      %v1890 = vadd.f32 0.0, %v1889
      %1891 = vmatmul.bf16.gmra.mxu0 %v1807
      %v1892 = vpop.f32.mrf.mxu0
      %v1893 = vadd.f32 0.0, %v1892
      %v1894 = vpop.f32.mrf.mxu0
      %v1895 = vadd.f32 0.0, %v1894
      %1896 = vmatmul.bf16.gmra.mxu0 %v1810
      %v1897 = vpop.f32.mrf.mxu0
      %v1898 = vadd.f32 0.0, %v1897
      %v1899 = vpop.f32.mrf.mxu0
      %v1900 = vadd.f32 0.0, %v1899
      %1901 = vmatmul.bf16.gmra.mxu0 %v1813
      %v1902 = vpop.f32.mrf.mxu0
      %v1903 = vadd.f32 0.0, %v1902
      %v1904 = vpop.f32.mrf.mxu0
      %v1905 = vadd.f32 0.0, %v1904
      %1906 = vdwg.mxu0
      %v1907 = vadd.f32 %v1685, %v1828
      %v1908 = vadd.f32 %v1686, %v1830
      %v1909 = vadd.f32 %v1687, %v1833
      %v1910 = vadd.f32 %v1688, %v1835
      %v1911 = vadd.f32 %v1689, %v1838
      %v1912 = vadd.f32 %v1690, %v1840
      %v1913 = vadd.f32 %v1691, %v1843
      %v1914 = vadd.f32 %v1692, %v1845
      %v1915 = vadd.f32 %v1693, %v1848
      %v1916 = vadd.f32 %v1694, %v1850
      %v1917 = vadd.f32 %v1695, %v1853
      %v1918 = vadd.f32 %v1696, %v1855
      %v1919 = vadd.f32 %v1697, %v1858
      %v1920 = vadd.f32 %v1698, %v1860
      %v1921 = vadd.f32 %v1699, %v1863
      %v1922 = vadd.f32 %v1700, %v1865
      %v1923 = vadd.f32 %v1701, %v1868
      %v1924 = vadd.f32 %v1702, %v1870
      %v1925 = vadd.f32 %v1703, %v1873
      %v1926 = vadd.f32 %v1704, %v1875
      %v1927 = vadd.f32 %v1705, %v1878
      %v1928 = vadd.f32 %v1706, %v1880
      %v1929 = vadd.f32 %v1707, %v1883
      %v1930 = vadd.f32 %v1708, %v1885
      %v1931 = vadd.f32 %v1709, %v1888
      %v1932 = vadd.f32 %v1710, %v1890
      %v1933 = vadd.f32 %v1711, %v1893
      %v1934 = vadd.f32 %v1712, %v1895
      %v1935 = vadd.f32 %v1713, %v1898
      %v1936 = vadd.f32 %v1714, %v1900
      %v1937 = vadd.f32 %v1715, %v1903
      %v1938 = vadd.f32 %v1716, %v1905
      %s1939 = scalar_lea.vmem [#allocation2], 48
      %v1940 = vld [vmem:[%s1939] sm:$0xff]
      %v1941 = vld [vmem:[%s1939 + $0x8] sm:$0xff]
      %v1942 = vld [vmem:[%s1939 + $0x18] sm:$0xff]
      %v1943 = vld [vmem:[%s1939 + $0x20] sm:$0xff]
      %v1944 = vld [vmem:[%s1939 + $0x30] sm:$0xff]
      %v1945 = vld [vmem:[%s1939 + $0x38] sm:$0xff]
      %v1946 = vld [vmem:[%s1939 + $0x48] sm:$0xff]
      %v1947 = vld [vmem:[%s1939 + $0x50] sm:$0xff]
      %v1948 = vld [vmem:[%s1939 + $0x60] sm:$0xff]
      %v1949 = vld [vmem:[%s1939 + $0x68] sm:$0xff]
      %v1950 = vld [vmem:[%s1939 + $0x78] sm:$0xff]
      %v1951 = vld [vmem:[%s1939 + $0x80] sm:$0xff]
      %v1952 = vld [vmem:[%s1939 + $0x90] sm:$0xff]
      %v1953 = vld [vmem:[%s1939 + $0x98] sm:$0xff]
      %v1954 = vld [vmem:[%s1939 + $0xa8] sm:$0xff]
      %v1955 = vld [vmem:[%s1939 + $0xb0] sm:$0xff]
      %v1956 = vld [vmem:[%s1939 + $0xc0] sm:$0xff]
      %v1957 = vld [vmem:[%s1939 + $0xc8] sm:$0xff]
      %v1958 = vld [vmem:[%s1939 + $0xd8] sm:$0xff]
      %v1959 = vld [vmem:[%s1939 + $0xe0] sm:$0xff]
      %v1960 = vld [vmem:[%s1939 + $0xf0] sm:$0xff]
      %v1961 = vld [vmem:[%s1939 + $0xf8] sm:$0xff]
      %v1962 = vld [vmem:[%s1939 + $0x108] sm:$0xff]
      %v1963 = vld [vmem:[%s1939 + $0x110] sm:$0xff]
      %v1964 = vld [vmem:[%s1939 + $0x120] sm:$0xff]
      %v1965 = vld [vmem:[%s1939 + $0x128] sm:$0xff]
      %v1966 = vld [vmem:[%s1939 + $0x138] sm:$0xff]
      %v1967 = vld [vmem:[%s1939 + $0x140] sm:$0xff]
      %v1968 = vld [vmem:[%s1939 + $0x150] sm:$0xff]
      %v1969 = vld [vmem:[%s1939 + $0x158] sm:$0xff]
      %v1970 = vld [vmem:[%s1939 + $0x168] sm:$0xff]
      %v1971 = vld [vmem:[%s1939 + $0x170] sm:$0xff]
      %v1972 = vpack.c.bf16 %v1941, %v1940
      %v1973 = vpack.c.bf16 %v1943, %v1942
      %v1974 = vpack.c.bf16 %v1945, %v1944
      %v1975 = vpack.c.bf16 %v1947, %v1946
      %v1976 = vpack.c.bf16 %v1949, %v1948
      %v1977 = vpack.c.bf16 %v1951, %v1950
      %v1978 = vpack.c.bf16 %v1953, %v1952
      %v1979 = vpack.c.bf16 %v1955, %v1954
      %v1980 = vpack.c.bf16 %v1957, %v1956
      %v1981 = vpack.c.bf16 %v1959, %v1958
      %v1982 = vpack.c.bf16 %v1961, %v1960
      %v1983 = vpack.c.bf16 %v1963, %v1962
      %v1984 = vpack.c.bf16 %v1965, %v1964
      %v1985 = vpack.c.bf16 %v1967, %v1966
      %v1986 = vpack.c.bf16 %v1969, %v1968
      %v1987 = vpack.c.bf16 %v1971, %v1970
      %s1988 = scalar_lea.vmem %s5, 24
      %v1989 = vld [vmem:[%s1988] sm:$0xf]
      %v1991 = vsel %vm410, %v1972, 0
      %v1994 = vsel %vm410, %v1973, 0
      %v1997 = vsel %vm410, %v1974, 0
      %v2000 = vsel %vm410, %v1975, 0
      %v2003 = vsel %vm410, %v1976, 0
      %v2006 = vsel %vm410, %v1977, 0
      %v2009 = vsel %vm410, %v1978, 0
      %v2012 = vsel %vm410, %v1979, 0
      %v2015 = vsel %vm410, %v1980, 0
      %v2018 = vsel %vm410, %v1981, 0
      %v2021 = vsel %vm410, %v1982, 0
      %v2024 = vsel %vm410, %v1983, 0
      %v2027 = vsel %vm410, %v1984, 0
      %v2030 = vsel %vm410, %v1985, 0
      %v2033 = vsel %vm410, %v1986, 0
      %v2036 = vsel %vm410, %v1987, 0
      %v2039 = vsel %vm459, %v1989, 0
      %2041 = vmatpush.bf16.msra.mxu0 0
      %2042 = vmatpush.bf16.msra.mxu0 0
      %2043 = vmatpush.bf16.msra.mxu0 0
      %2044 = vmatpush.bf16.msra.mxu0 0
      %2045 = vmatpush.bf16.msra.mxu0 0
      %2046 = vmatpush.bf16.msra.mxu0 0
      %2047 = vmatpush.bf16.msra.mxu0 0
      %2048 = vmatpush.bf16.msra.mxu0 %v2039
      %2049 = vmatmul.bf16.gmra.mxu0 %v1991
      %v2050 = vpop.f32.mrf.mxu0
      %v2051 = vadd.f32 0.0, %v2050
      %v2052 = vpop.f32.mrf.mxu0
      %v2053 = vadd.f32 0.0, %v2052
      %2054 = vmatmul.bf16.gmra.mxu0 %v1994
      %v2055 = vpop.f32.mrf.mxu0
      %v2056 = vadd.f32 0.0, %v2055
      %v2057 = vpop.f32.mrf.mxu0
      %v2058 = vadd.f32 0.0, %v2057
      %2059 = vmatmul.bf16.gmra.mxu0 %v1997
      %v2060 = vpop.f32.mrf.mxu0
      %v2061 = vadd.f32 0.0, %v2060
      %v2062 = vpop.f32.mrf.mxu0
      %v2063 = vadd.f32 0.0, %v2062
      %2064 = vmatmul.bf16.gmra.mxu0 %v2000
      %v2065 = vpop.f32.mrf.mxu0
      %v2066 = vadd.f32 0.0, %v2065
      %v2067 = vpop.f32.mrf.mxu0
      %v2068 = vadd.f32 0.0, %v2067
      %2069 = vmatmul.bf16.gmra.mxu0 %v2003
      %v2070 = vpop.f32.mrf.mxu0
      %v2071 = vadd.f32 0.0, %v2070
      %v2072 = vpop.f32.mrf.mxu0
      %v2073 = vadd.f32 0.0, %v2072
      %2074 = vmatmul.bf16.gmra.mxu0 %v2006
      %v2075 = vpop.f32.mrf.mxu0
      %v2076 = vadd.f32 0.0, %v2075
      %v2077 = vpop.f32.mrf.mxu0
      %v2078 = vadd.f32 0.0, %v2077
      %2079 = vmatmul.bf16.gmra.mxu0 %v2009
      %v2080 = vpop.f32.mrf.mxu0
      %v2081 = vadd.f32 0.0, %v2080
      %v2082 = vpop.f32.mrf.mxu0
      %v2083 = vadd.f32 0.0, %v2082
      %2084 = vmatmul.bf16.gmra.mxu0 %v2012
      %v2085 = vpop.f32.mrf.mxu0
      %v2086 = vadd.f32 0.0, %v2085
      %v2087 = vpop.f32.mrf.mxu0
      %v2088 = vadd.f32 0.0, %v2087
      %2089 = vmatmul.bf16.gmra.mxu0 %v2015
      %v2090 = vpop.f32.mrf.mxu0
      %v2091 = vadd.f32 0.0, %v2090
      %v2092 = vpop.f32.mrf.mxu0
      %v2093 = vadd.f32 0.0, %v2092
      %2094 = vmatmul.bf16.gmra.mxu0 %v2018
      %v2095 = vpop.f32.mrf.mxu0
      %v2096 = vadd.f32 0.0, %v2095
      %v2097 = vpop.f32.mrf.mxu0
      %v2098 = vadd.f32 0.0, %v2097
      %2099 = vmatmul.bf16.gmra.mxu0 %v2021
      %v2100 = vpop.f32.mrf.mxu0
      %v2101 = vadd.f32 0.0, %v2100
      %v2102 = vpop.f32.mrf.mxu0
      %v2103 = vadd.f32 0.0, %v2102
      %2104 = vmatmul.bf16.gmra.mxu0 %v2024
      %v2105 = vpop.f32.mrf.mxu0
      %v2106 = vadd.f32 0.0, %v2105
      %v2107 = vpop.f32.mrf.mxu0
      %v2108 = vadd.f32 0.0, %v2107
      %2109 = vmatmul.bf16.gmra.mxu0 %v2027
      %v2110 = vpop.f32.mrf.mxu0
      %v2111 = vadd.f32 0.0, %v2110
      %v2112 = vpop.f32.mrf.mxu0
      %v2113 = vadd.f32 0.0, %v2112
      %2114 = vmatmul.bf16.gmra.mxu0 %v2030
      %v2115 = vpop.f32.mrf.mxu0
      %v2116 = vadd.f32 0.0, %v2115
      %v2117 = vpop.f32.mrf.mxu0
      %v2118 = vadd.f32 0.0, %v2117
      %2119 = vmatmul.bf16.gmra.mxu0 %v2033
      %v2120 = vpop.f32.mrf.mxu0
      %v2121 = vadd.f32 0.0, %v2120
      %v2122 = vpop.f32.mrf.mxu0
      %v2123 = vadd.f32 0.0, %v2122
      %2124 = vmatmul.bf16.gmra.mxu0 %v2036
      %v2125 = vpop.f32.mrf.mxu0
      %v2126 = vadd.f32 0.0, %v2125
      %v2127 = vpop.f32.mrf.mxu0
      %v2128 = vadd.f32 0.0, %v2127
      %2129 = vdwg.mxu0
      %v2130 = vadd.f32 %v1907, %v2051
      %v2131 = vadd.f32 %v1908, %v2053
      %v2132 = vadd.f32 %v1909, %v2056
      %v2133 = vadd.f32 %v1910, %v2058
      %v2134 = vadd.f32 %v1911, %v2061
      %v2135 = vadd.f32 %v1912, %v2063
      %v2136 = vadd.f32 %v1913, %v2066
      %v2137 = vadd.f32 %v1914, %v2068
      %v2138 = vadd.f32 %v1915, %v2071
      %v2139 = vadd.f32 %v1916, %v2073
      %v2140 = vadd.f32 %v1917, %v2076
      %v2141 = vadd.f32 %v1918, %v2078
      %v2142 = vadd.f32 %v1919, %v2081
      %v2143 = vadd.f32 %v1920, %v2083
      %v2144 = vadd.f32 %v1921, %v2086
      %v2145 = vadd.f32 %v1922, %v2088
      %v2146 = vadd.f32 %v1923, %v2091
      %v2147 = vadd.f32 %v1924, %v2093
      %v2148 = vadd.f32 %v1925, %v2096
      %v2149 = vadd.f32 %v1926, %v2098
      %v2150 = vadd.f32 %v1927, %v2101
      %v2151 = vadd.f32 %v1928, %v2103
      %v2152 = vadd.f32 %v1929, %v2106
      %v2153 = vadd.f32 %v1930, %v2108
      %v2154 = vadd.f32 %v1931, %v2111
      %v2155 = vadd.f32 %v1932, %v2113
      %v2156 = vadd.f32 %v1933, %v2116
      %v2157 = vadd.f32 %v1934, %v2118
      %v2158 = vadd.f32 %v1935, %v2121
      %v2159 = vadd.f32 %v1936, %v2123
      %v2160 = vadd.f32 %v1937, %v2126
      %v2161 = vadd.f32 %v1938, %v2128
      %v2162 = vld [vmem:[%s1939 + $0x1] sm:$0xff]
      %v2163 = vld [vmem:[%s1939 + $0x9] sm:$0xff]
      %v2164 = vld [vmem:[%s1939 + $0x19] sm:$0xff]
      %v2165 = vld [vmem:[%s1939 + $0x21] sm:$0xff]
      %v2166 = vld [vmem:[%s1939 + $0x31] sm:$0xff]
      %v2167 = vld [vmem:[%s1939 + $0x39] sm:$0xff]
      %v2168 = vld [vmem:[%s1939 + $0x49] sm:$0xff]
      %v2169 = vld [vmem:[%s1939 + $0x51] sm:$0xff]
      %v2170 = vld [vmem:[%s1939 + $0x61] sm:$0xff]
      %v2171 = vld [vmem:[%s1939 + $0x69] sm:$0xff]
      %v2172 = vld [vmem:[%s1939 + $0x79] sm:$0xff]
      %v2173 = vld [vmem:[%s1939 + $0x81] sm:$0xff]
      %v2174 = vld [vmem:[%s1939 + $0x91] sm:$0xff]
      %v2175 = vld [vmem:[%s1939 + $0x99] sm:$0xff]
      %v2176 = vld [vmem:[%s1939 + $0xa9] sm:$0xff]
      %v2177 = vld [vmem:[%s1939 + $0xb1] sm:$0xff]
      %v2178 = vld [vmem:[%s1939 + $0xc1] sm:$0xff]
      %v2179 = vld [vmem:[%s1939 + $0xc9] sm:$0xff]
      %v2180 = vld [vmem:[%s1939 + $0xd9] sm:$0xff]
      %v2181 = vld [vmem:[%s1939 + $0xe1] sm:$0xff]
      %v2182 = vld [vmem:[%s1939 + $0xf1] sm:$0xff]
      %v2183 = vld [vmem:[%s1939 + $0xf9] sm:$0xff]
      %v2184 = vld [vmem:[%s1939 + $0x109] sm:$0xff]
      %v2185 = vld [vmem:[%s1939 + $0x111] sm:$0xff]
      %v2186 = vld [vmem:[%s1939 + $0x121] sm:$0xff]
      %v2187 = vld [vmem:[%s1939 + $0x129] sm:$0xff]
      %v2188 = vld [vmem:[%s1939 + $0x139] sm:$0xff]
      %v2189 = vld [vmem:[%s1939 + $0x141] sm:$0xff]
      %v2190 = vld [vmem:[%s1939 + $0x151] sm:$0xff]
      %v2191 = vld [vmem:[%s1939 + $0x159] sm:$0xff]
      %v2192 = vld [vmem:[%s1939 + $0x169] sm:$0xff]
      %v2193 = vld [vmem:[%s1939 + $0x171] sm:$0xff]
      %v2194 = vpack.c.bf16 %v2163, %v2162
      %v2195 = vpack.c.bf16 %v2165, %v2164
      %v2196 = vpack.c.bf16 %v2167, %v2166
      %v2197 = vpack.c.bf16 %v2169, %v2168
      %v2198 = vpack.c.bf16 %v2171, %v2170
      %v2199 = vpack.c.bf16 %v2173, %v2172
      %v2200 = vpack.c.bf16 %v2175, %v2174
      %v2201 = vpack.c.bf16 %v2177, %v2176
      %v2202 = vpack.c.bf16 %v2179, %v2178
      %v2203 = vpack.c.bf16 %v2181, %v2180
      %v2204 = vpack.c.bf16 %v2183, %v2182
      %v2205 = vpack.c.bf16 %v2185, %v2184
      %v2206 = vpack.c.bf16 %v2187, %v2186
      %v2207 = vpack.c.bf16 %v2189, %v2188
      %v2208 = vpack.c.bf16 %v2191, %v2190
      %v2209 = vpack.c.bf16 %v2193, %v2192
      %s2210 = scalar_lea.vmem %s5, 28
      %v2211 = vld [vmem:[%s2210] sm:$0xf]
      %v2213 = vsel %vm410, %v2194, 0
      %v2216 = vsel %vm410, %v2195, 0
      %v2219 = vsel %vm410, %v2196, 0
      %v2222 = vsel %vm410, %v2197, 0
      %v2225 = vsel %vm410, %v2198, 0
      %v2228 = vsel %vm410, %v2199, 0
      %v2231 = vsel %vm410, %v2200, 0
      %v2234 = vsel %vm410, %v2201, 0
      %v2237 = vsel %vm410, %v2202, 0
      %v2240 = vsel %vm410, %v2203, 0
      %v2243 = vsel %vm410, %v2204, 0
      %v2246 = vsel %vm410, %v2205, 0
      %v2249 = vsel %vm410, %v2206, 0
      %v2252 = vsel %vm410, %v2207, 0
      %v2255 = vsel %vm410, %v2208, 0
      %v2258 = vsel %vm410, %v2209, 0
      %v2261 = vsel %vm459, %v2211, 0
      %2263 = vmatpush.bf16.msra.mxu0 0
      %2264 = vmatpush.bf16.msra.mxu0 0
      %2265 = vmatpush.bf16.msra.mxu0 0
      %2266 = vmatpush.bf16.msra.mxu0 0
      %2267 = vmatpush.bf16.msra.mxu0 0
      %2268 = vmatpush.bf16.msra.mxu0 0
      %2269 = vmatpush.bf16.msra.mxu0 0
      %2270 = vmatpush.bf16.msra.mxu0 %v2261
      %2271 = vmatmul.bf16.gmra.mxu0 %v2213
      %v2272 = vpop.f32.mrf.mxu0
      %v2273 = vadd.f32 0.0, %v2272
      %v2274 = vpop.f32.mrf.mxu0
      %v2275 = vadd.f32 0.0, %v2274
      %2276 = vmatmul.bf16.gmra.mxu0 %v2216
      %v2277 = vpop.f32.mrf.mxu0
      %v2278 = vadd.f32 0.0, %v2277
      %v2279 = vpop.f32.mrf.mxu0
      %v2280 = vadd.f32 0.0, %v2279
      %2281 = vmatmul.bf16.gmra.mxu0 %v2219
      %v2282 = vpop.f32.mrf.mxu0
      %v2283 = vadd.f32 0.0, %v2282
      %v2284 = vpop.f32.mrf.mxu0
      %v2285 = vadd.f32 0.0, %v2284
      %2286 = vmatmul.bf16.gmra.mxu0 %v2222
      %v2287 = vpop.f32.mrf.mxu0
      %v2288 = vadd.f32 0.0, %v2287
      %v2289 = vpop.f32.mrf.mxu0
      %v2290 = vadd.f32 0.0, %v2289
      %2291 = vmatmul.bf16.gmra.mxu0 %v2225
      %v2292 = vpop.f32.mrf.mxu0
      %v2293 = vadd.f32 0.0, %v2292
      %v2294 = vpop.f32.mrf.mxu0
      %v2295 = vadd.f32 0.0, %v2294
      %2296 = vmatmul.bf16.gmra.mxu0 %v2228
      %v2297 = vpop.f32.mrf.mxu0
      %v2298 = vadd.f32 0.0, %v2297
      %v2299 = vpop.f32.mrf.mxu0
      %v2300 = vadd.f32 0.0, %v2299
      %2301 = vmatmul.bf16.gmra.mxu0 %v2231
      %v2302 = vpop.f32.mrf.mxu0
      %v2303 = vadd.f32 0.0, %v2302
      %v2304 = vpop.f32.mrf.mxu0
      %v2305 = vadd.f32 0.0, %v2304
      %2306 = vmatmul.bf16.gmra.mxu0 %v2234
      %v2307 = vpop.f32.mrf.mxu0
      %v2308 = vadd.f32 0.0, %v2307
      %v2309 = vpop.f32.mrf.mxu0
      %v2310 = vadd.f32 0.0, %v2309
      %2311 = vmatmul.bf16.gmra.mxu0 %v2237
      %v2312 = vpop.f32.mrf.mxu0
      %v2313 = vadd.f32 0.0, %v2312
      %v2314 = vpop.f32.mrf.mxu0
      %v2315 = vadd.f32 0.0, %v2314
      %2316 = vmatmul.bf16.gmra.mxu0 %v2240
      %v2317 = vpop.f32.mrf.mxu0
      %v2318 = vadd.f32 0.0, %v2317
      %v2319 = vpop.f32.mrf.mxu0
      %v2320 = vadd.f32 0.0, %v2319
      %2321 = vmatmul.bf16.gmra.mxu0 %v2243
      %v2322 = vpop.f32.mrf.mxu0
      %v2323 = vadd.f32 0.0, %v2322
      %v2324 = vpop.f32.mrf.mxu0
      %v2325 = vadd.f32 0.0, %v2324
      %2326 = vmatmul.bf16.gmra.mxu0 %v2246
      %v2327 = vpop.f32.mrf.mxu0
      %v2328 = vadd.f32 0.0, %v2327
      %v2329 = vpop.f32.mrf.mxu0
      %v2330 = vadd.f32 0.0, %v2329
      %2331 = vmatmul.bf16.gmra.mxu0 %v2249
      %v2332 = vpop.f32.mrf.mxu0
      %v2333 = vadd.f32 0.0, %v2332
      %v2334 = vpop.f32.mrf.mxu0
      %v2335 = vadd.f32 0.0, %v2334
      %2336 = vmatmul.bf16.gmra.mxu0 %v2252
      %v2337 = vpop.f32.mrf.mxu0
      %v2338 = vadd.f32 0.0, %v2337
      %v2339 = vpop.f32.mrf.mxu0
      %v2340 = vadd.f32 0.0, %v2339
      %2341 = vmatmul.bf16.gmra.mxu0 %v2255
      %v2342 = vpop.f32.mrf.mxu0
      %v2343 = vadd.f32 0.0, %v2342
      %v2344 = vpop.f32.mrf.mxu0
      %v2345 = vadd.f32 0.0, %v2344
      %2346 = vmatmul.bf16.gmra.mxu0 %v2258
      %v2347 = vpop.f32.mrf.mxu0
      %v2348 = vadd.f32 0.0, %v2347
      %v2349 = vpop.f32.mrf.mxu0
      %v2350 = vadd.f32 0.0, %v2349
      %2351 = vdwg.mxu0
      %v2352 = vadd.f32 %v2130, %v2273
      %v2353 = vadd.f32 %v2131, %v2275
      %v2354 = vadd.f32 %v2132, %v2278
      %v2355 = vadd.f32 %v2133, %v2280
      %v2356 = vadd.f32 %v2134, %v2283
      %v2357 = vadd.f32 %v2135, %v2285
      %v2358 = vadd.f32 %v2136, %v2288
      %v2359 = vadd.f32 %v2137, %v2290
      %v2360 = vadd.f32 %v2138, %v2293
      %v2361 = vadd.f32 %v2139, %v2295
      %v2362 = vadd.f32 %v2140, %v2298
      %v2363 = vadd.f32 %v2141, %v2300
      %v2364 = vadd.f32 %v2142, %v2303
      %v2365 = vadd.f32 %v2143, %v2305
      %v2366 = vadd.f32 %v2144, %v2308
      %v2367 = vadd.f32 %v2145, %v2310
      %v2368 = vadd.f32 %v2146, %v2313
      %v2369 = vadd.f32 %v2147, %v2315
      %v2370 = vadd.f32 %v2148, %v2318
      %v2371 = vadd.f32 %v2149, %v2320
      %v2372 = vadd.f32 %v2150, %v2323
      %v2373 = vadd.f32 %v2151, %v2325
      %v2374 = vadd.f32 %v2152, %v2328
      %v2375 = vadd.f32 %v2153, %v2330
      %v2376 = vadd.f32 %v2154, %v2333
      %v2377 = vadd.f32 %v2155, %v2335
      %v2378 = vadd.f32 %v2156, %v2338
      %v2379 = vadd.f32 %v2157, %v2340
      %v2380 = vadd.f32 %v2158, %v2343
      %v2381 = vadd.f32 %v2159, %v2345
      %v2382 = vadd.f32 %v2160, %v2348
      %v2383 = vadd.f32 %v2161, %v2350
      %v2384 = vld [vmem:[%s1939 + $0x2] sm:$0xff]
      %v2385 = vld [vmem:[%s1939 + $0xa] sm:$0xff]
      %v2386 = vld [vmem:[%s1939 + $0x1a] sm:$0xff]
      %v2387 = vld [vmem:[%s1939 + $0x22] sm:$0xff]
      %v2388 = vld [vmem:[%s1939 + $0x32] sm:$0xff]
      %v2389 = vld [vmem:[%s1939 + $0x3a] sm:$0xff]
      %v2390 = vld [vmem:[%s1939 + $0x4a] sm:$0xff]
      %v2391 = vld [vmem:[%s1939 + $0x52] sm:$0xff]
      %v2392 = vld [vmem:[%s1939 + $0x62] sm:$0xff]
      %v2393 = vld [vmem:[%s1939 + $0x6a] sm:$0xff]
      %v2394 = vld [vmem:[%s1939 + $0x7a] sm:$0xff]
      %v2395 = vld [vmem:[%s1939 + $0x82] sm:$0xff]
      %v2396 = vld [vmem:[%s1939 + $0x92] sm:$0xff]
      %v2397 = vld [vmem:[%s1939 + $0x9a] sm:$0xff]
      %v2398 = vld [vmem:[%s1939 + $0xaa] sm:$0xff]
      %v2399 = vld [vmem:[%s1939 + $0xb2] sm:$0xff]
      %v2400 = vld [vmem:[%s1939 + $0xc2] sm:$0xff]
      %v2401 = vld [vmem:[%s1939 + $0xca] sm:$0xff]
      %v2402 = vld [vmem:[%s1939 + $0xda] sm:$0xff]
      %v2403 = vld [vmem:[%s1939 + $0xe2] sm:$0xff]
      %v2404 = vld [vmem:[%s1939 + $0xf2] sm:$0xff]
      %v2405 = vld [vmem:[%s1939 + $0xfa] sm:$0xff]
      %v2406 = vld [vmem:[%s1939 + $0x10a] sm:$0xff]
      %v2407 = vld [vmem:[%s1939 + $0x112] sm:$0xff]
      %v2408 = vld [vmem:[%s1939 + $0x122] sm:$0xff]
      %v2409 = vld [vmem:[%s1939 + $0x12a] sm:$0xff]
      %v2410 = vld [vmem:[%s1939 + $0x13a] sm:$0xff]
      %v2411 = vld [vmem:[%s1939 + $0x142] sm:$0xff]
      %v2412 = vld [vmem:[%s1939 + $0x152] sm:$0xff]
      %v2413 = vld [vmem:[%s1939 + $0x15a] sm:$0xff]
      %v2414 = vld [vmem:[%s1939 + $0x16a] sm:$0xff]
      %v2415 = vld [vmem:[%s1939 + $0x172] sm:$0xff]
      %v2416 = vpack.c.bf16 %v2385, %v2384
      %v2417 = vpack.c.bf16 %v2387, %v2386
      %v2418 = vpack.c.bf16 %v2389, %v2388
      %v2419 = vpack.c.bf16 %v2391, %v2390
      %v2420 = vpack.c.bf16 %v2393, %v2392
      %v2421 = vpack.c.bf16 %v2395, %v2394
      %v2422 = vpack.c.bf16 %v2397, %v2396
      %v2423 = vpack.c.bf16 %v2399, %v2398
      %v2424 = vpack.c.bf16 %v2401, %v2400
      %v2425 = vpack.c.bf16 %v2403, %v2402
      %v2426 = vpack.c.bf16 %v2405, %v2404
      %v2427 = vpack.c.bf16 %v2407, %v2406
      %v2428 = vpack.c.bf16 %v2409, %v2408
      %v2429 = vpack.c.bf16 %v2411, %v2410
      %v2430 = vpack.c.bf16 %v2413, %v2412
      %v2431 = vpack.c.bf16 %v2415, %v2414
      %s2432 = scalar_lea.vmem %s5, 32
      %v2433 = vld [vmem:[%s2432] sm:$0xf]
      %v2435 = vsel %vm410, %v2416, 0
      %v2438 = vsel %vm410, %v2417, 0
      %v2441 = vsel %vm410, %v2418, 0
      %v2444 = vsel %vm410, %v2419, 0
      %v2447 = vsel %vm410, %v2420, 0
      %v2450 = vsel %vm410, %v2421, 0
      %v2453 = vsel %vm410, %v2422, 0
      %v2456 = vsel %vm410, %v2423, 0
      %v2459 = vsel %vm410, %v2424, 0
      %v2462 = vsel %vm410, %v2425, 0
      %v2465 = vsel %vm410, %v2426, 0
      %v2468 = vsel %vm410, %v2427, 0
      %v2471 = vsel %vm410, %v2428, 0
      %v2474 = vsel %vm410, %v2429, 0
      %v2477 = vsel %vm410, %v2430, 0
      %v2480 = vsel %vm410, %v2431, 0
      %v2483 = vsel %vm459, %v2433, 0
      %2485 = vmatpush.bf16.msra.mxu0 0
      %2486 = vmatpush.bf16.msra.mxu0 0
      %2487 = vmatpush.bf16.msra.mxu0 0
      %2488 = vmatpush.bf16.msra.mxu0 0
      %2489 = vmatpush.bf16.msra.mxu0 0
      %2490 = vmatpush.bf16.msra.mxu0 0
      %2491 = vmatpush.bf16.msra.mxu0 0
      %2492 = vmatpush.bf16.msra.mxu0 %v2483
      %2493 = vmatmul.bf16.gmra.mxu0 %v2435
      %v2494 = vpop.f32.mrf.mxu0
      %v2495 = vadd.f32 0.0, %v2494
      %v2496 = vpop.f32.mrf.mxu0
      %v2497 = vadd.f32 0.0, %v2496
      %2498 = vmatmul.bf16.gmra.mxu0 %v2438
      %v2499 = vpop.f32.mrf.mxu0
      %v2500 = vadd.f32 0.0, %v2499
      %v2501 = vpop.f32.mrf.mxu0
      %v2502 = vadd.f32 0.0, %v2501
      %2503 = vmatmul.bf16.gmra.mxu0 %v2441
      %v2504 = vpop.f32.mrf.mxu0
      %v2505 = vadd.f32 0.0, %v2504
      %v2506 = vpop.f32.mrf.mxu0
      %v2507 = vadd.f32 0.0, %v2506
      %2508 = vmatmul.bf16.gmra.mxu0 %v2444
      %v2509 = vpop.f32.mrf.mxu0
      %v2510 = vadd.f32 0.0, %v2509
      %v2511 = vpop.f32.mrf.mxu0
      %v2512 = vadd.f32 0.0, %v2511
      %2513 = vmatmul.bf16.gmra.mxu0 %v2447
      %v2514 = vpop.f32.mrf.mxu0
      %v2515 = vadd.f32 0.0, %v2514
      %v2516 = vpop.f32.mrf.mxu0
      %v2517 = vadd.f32 0.0, %v2516
      %2518 = vmatmul.bf16.gmra.mxu0 %v2450
      %v2519 = vpop.f32.mrf.mxu0
      %v2520 = vadd.f32 0.0, %v2519
      %v2521 = vpop.f32.mrf.mxu0
      %v2522 = vadd.f32 0.0, %v2521
      %2523 = vmatmul.bf16.gmra.mxu0 %v2453
      %v2524 = vpop.f32.mrf.mxu0
      %v2525 = vadd.f32 0.0, %v2524
      %v2526 = vpop.f32.mrf.mxu0
      %v2527 = vadd.f32 0.0, %v2526
      %2528 = vmatmul.bf16.gmra.mxu0 %v2456
      %v2529 = vpop.f32.mrf.mxu0
      %v2530 = vadd.f32 0.0, %v2529
      %v2531 = vpop.f32.mrf.mxu0
      %v2532 = vadd.f32 0.0, %v2531
      %2533 = vmatmul.bf16.gmra.mxu0 %v2459
      %v2534 = vpop.f32.mrf.mxu0
      %v2535 = vadd.f32 0.0, %v2534
      %v2536 = vpop.f32.mrf.mxu0
      %v2537 = vadd.f32 0.0, %v2536
      %2538 = vmatmul.bf16.gmra.mxu0 %v2462
      %v2539 = vpop.f32.mrf.mxu0
      %v2540 = vadd.f32 0.0, %v2539
      %v2541 = vpop.f32.mrf.mxu0
      %v2542 = vadd.f32 0.0, %v2541
      %2543 = vmatmul.bf16.gmra.mxu0 %v2465
      %v2544 = vpop.f32.mrf.mxu0
      %v2545 = vadd.f32 0.0, %v2544
      %v2546 = vpop.f32.mrf.mxu0
      %v2547 = vadd.f32 0.0, %v2546
      %2548 = vmatmul.bf16.gmra.mxu0 %v2468
      %v2549 = vpop.f32.mrf.mxu0
      %v2550 = vadd.f32 0.0, %v2549
      %v2551 = vpop.f32.mrf.mxu0
      %v2552 = vadd.f32 0.0, %v2551
      %2553 = vmatmul.bf16.gmra.mxu0 %v2471
      %v2554 = vpop.f32.mrf.mxu0
      %v2555 = vadd.f32 0.0, %v2554
      %v2556 = vpop.f32.mrf.mxu0
      %v2557 = vadd.f32 0.0, %v2556
      %2558 = vmatmul.bf16.gmra.mxu0 %v2474
      %v2559 = vpop.f32.mrf.mxu0
      %v2560 = vadd.f32 0.0, %v2559
      %v2561 = vpop.f32.mrf.mxu0
      %v2562 = vadd.f32 0.0, %v2561
      %2563 = vmatmul.bf16.gmra.mxu0 %v2477
      %v2564 = vpop.f32.mrf.mxu0
      %v2565 = vadd.f32 0.0, %v2564
      %v2566 = vpop.f32.mrf.mxu0
      %v2567 = vadd.f32 0.0, %v2566
      %2568 = vmatmul.bf16.gmra.mxu0 %v2480
      %v2569 = vpop.f32.mrf.mxu0
      %v2570 = vadd.f32 0.0, %v2569
      %v2571 = vpop.f32.mrf.mxu0
      %v2572 = vadd.f32 0.0, %v2571
      %2573 = vdwg.mxu0
      %v2574 = vadd.f32 %v2352, %v2495
      %v2575 = vadd.f32 %v2353, %v2497
      %v2576 = vadd.f32 %v2354, %v2500
      %v2577 = vadd.f32 %v2355, %v2502
      %v2578 = vadd.f32 %v2356, %v2505
      %v2579 = vadd.f32 %v2357, %v2507
      %v2580 = vadd.f32 %v2358, %v2510
      %v2581 = vadd.f32 %v2359, %v2512
      %v2582 = vadd.f32 %v2360, %v2515
      %v2583 = vadd.f32 %v2361, %v2517
      %v2584 = vadd.f32 %v2362, %v2520
      %v2585 = vadd.f32 %v2363, %v2522
      %v2586 = vadd.f32 %v2364, %v2525
      %v2587 = vadd.f32 %v2365, %v2527
      %v2588 = vadd.f32 %v2366, %v2530
      %v2589 = vadd.f32 %v2367, %v2532
      %v2590 = vadd.f32 %v2368, %v2535
      %v2591 = vadd.f32 %v2369, %v2537
      %v2592 = vadd.f32 %v2370, %v2540
      %v2593 = vadd.f32 %v2371, %v2542
      %v2594 = vadd.f32 %v2372, %v2545
      %v2595 = vadd.f32 %v2373, %v2547
      %v2596 = vadd.f32 %v2374, %v2550
      %v2597 = vadd.f32 %v2375, %v2552
      %v2598 = vadd.f32 %v2376, %v2555
      %v2599 = vadd.f32 %v2377, %v2557
      %v2600 = vadd.f32 %v2378, %v2560
      %v2601 = vadd.f32 %v2379, %v2562
      %v2602 = vadd.f32 %v2380, %v2565
      %v2603 = vadd.f32 %v2381, %v2567
      %v2604 = vadd.f32 %v2382, %v2570
      %v2605 = vadd.f32 %v2383, %v2572
      %vm2606 = vcmask 31744
      %2607 = vst.msk [vmem:[%s251] sm:$0xff] %vm2606, %v2574
      %2608 = vst.msk [vmem:[%s251 + $0x8] sm:$0xff] %vm2606, %v2575
      %2609 = vst.msk [vmem:[%s251 + $0x10] sm:$0xff] %vm2606, %v2576
      %2610 = vst.msk [vmem:[%s251 + $0x18] sm:$0xff] %vm2606, %v2577
      %2611 = vst.msk [vmem:[%s251 + $0x20] sm:$0xff] %vm2606, %v2578
      %2612 = vst.msk [vmem:[%s251 + $0x28] sm:$0xff] %vm2606, %v2579
      %2613 = vst.msk [vmem:[%s251 + $0x30] sm:$0xff] %vm2606, %v2580
      %2614 = vst.msk [vmem:[%s251 + $0x38] sm:$0xff] %vm2606, %v2581
      %2615 = vst.msk [vmem:[%s251 + $0x40] sm:$0xff] %vm2606, %v2582
      %2616 = vst.msk [vmem:[%s251 + $0x48] sm:$0xff] %vm2606, %v2583
      %2617 = vst.msk [vmem:[%s251 + $0x50] sm:$0xff] %vm2606, %v2584
      %2618 = vst.msk [vmem:[%s251 + $0x58] sm:$0xff] %vm2606, %v2585
      %2619 = vst.msk [vmem:[%s251 + $0x60] sm:$0xff] %vm2606, %v2586
      %2620 = vst.msk [vmem:[%s251 + $0x68] sm:$0xff] %vm2606, %v2587
      %2621 = vst.msk [vmem:[%s251 + $0x70] sm:$0xff] %vm2606, %v2588
      %2622 = vst.msk [vmem:[%s251 + $0x78] sm:$0xff] %vm2606, %v2589
      %2623 = vst.msk [vmem:[%s251 + $0x80] sm:$0xff] %vm2606, %v2590
      %2624 = vst.msk [vmem:[%s251 + $0x88] sm:$0xff] %vm2606, %v2591
      %2625 = vst.msk [vmem:[%s251 + $0x90] sm:$0xff] %vm2606, %v2592
      %2626 = vst.msk [vmem:[%s251 + $0x98] sm:$0xff] %vm2606, %v2593
      %2627 = vst.msk [vmem:[%s251 + $0xa0] sm:$0xff] %vm2606, %v2594
      %2628 = vst.msk [vmem:[%s251 + $0xa8] sm:$0xff] %vm2606, %v2595
      %2629 = vst.msk [vmem:[%s251 + $0xb0] sm:$0xff] %vm2606, %v2596
      %2630 = vst.msk [vmem:[%s251 + $0xb8] sm:$0xff] %vm2606, %v2597
      %2631 = vst.msk [vmem:[%s251 + $0xc0] sm:$0xff] %vm2606, %v2598
      %2632 = vst.msk [vmem:[%s251 + $0xc8] sm:$0xff] %vm2606, %v2599
      %2633 = vst.msk [vmem:[%s251 + $0xd0] sm:$0xff] %vm2606, %v2600
      %2634 = vst.msk [vmem:[%s251 + $0xd8] sm:$0xff] %vm2606, %v2601
      %2635 = vst.msk [vmem:[%s251 + $0xe0] sm:$0xff] %vm2606, %v2602
      %2636 = vst.msk [vmem:[%s251 + $0xe8] sm:$0xff] %vm2606, %v2603
      %2637 = vst.msk [vmem:[%s251 + $0xf0] sm:$0xff] %vm2606, %v2604
      %2638 = vst.msk [vmem:[%s251 + $0xf8] sm:$0xff] %vm2606, %v2605
      %p2639 = scmp.lt.s32.totalorder %s17, 1
      %s2640 = scalar_select %p2639, %s17, 1
      %s2641 = smul.addr %s2640, 32
      %s2642 = smul.addr %s2641, 8
      %s2643 = scalar_lea.vmem %s6, %s2642
      // Predicated region
      $region45: #{tpu_custom_call.1} parent=43 // pred_check
        %p2644 = pneg %p166
      $region46: #{tpu_custom_call.1} parent=43 // pred_check_branch
        %2646 = sbr.rel (%p2644) target = $region48
      $region47: #{tpu_custom_call.1} parent=43 // pred_region
        _
      $region48: #{tpu_custom_call.1} parent=43 // pred_fallthru
        _
    $region44: #{tpu_custom_call.1} parent=5 // pred_fallthru
      _
    %p2647 = scmp.le.s32.totalorder 2, %s12
    // Predicated region
    $region49: #{tpu_custom_call.1} parent=5 // pred_check
      %p2648 = pneg %p2647
    $region50: #{tpu_custom_call.1} parent=5 // pred_check_branch
      %2650 = sbr.rel (%p2648) target = $region52
    $region51: #{tpu_custom_call.1} parent=5 // pred_region
      %s2651 = ssub.s32 %s12, 2
      // Predicated region
      $region53: #{tpu_custom_call.1} parent=51 // pred_check
        %p2652 = pneg %p172
      $region54: #{tpu_custom_call.1} parent=51 // pred_check_branch
        %2654 = sbr.rel (%p2652) target = $region56
      $region55: #{tpu_custom_call.1} parent=51 // pred_region
        %p2655 = scmp.lt.s32.totalorder %s18, 1
        %s2656 = scalar_select %p2655, %s18, 1
        %s2657 = smul.addr %s2656, 32
        %s2658 = smul.addr %s2657, 8
        %s2659 = scalar_lea.vmem %s6, %s2658
      $region56: #{tpu_custom_call.1} parent=51 // pred_fallthru
        _
    $region52: #{tpu_custom_call.1} parent=5 // pred_fallthru
      _
  $region6: #{tpu_custom_call.1} parent=0 // loop_footer
    %s16 = sadd.s32 1, %s12
  $region7: #{tpu_custom_call.1} parent=0 // loop_footer_branch
    %11 = sbr.rel target = $region3
  $region8: #{tpu_custom_call.1} parent=0 // loop_exit
    _

</llo_original>
